<compile_context>
chip_gen: v7x
topology: tpu7x:2x2x1
jax: 0.10.0
libtpu: 0.0.40
codegen_flags: <defaults>
</compile_context>

<pallas_src>
import jax
import jax.numpy as jnp
from jax.experimental import pallas as pl
from jax.experimental.pallas import tpu as pltpu


# ----------------------------------------------------------------------------
# Pallas kernel
# ----------------------------------------------------------------------------
def _make_kernel(L, TL, stride, downsampling, needs_row_mask):
    """Builds the Bottleneck kernel closure for one (batch, L-tile) grid step."""

    def kernel(*refs):
        if stride == 1:
            (x_ref, xh_ref, w1_ref, b1_ref, w2_ref, b2_ref,
             w3_ref, b3_ref, *rest) = refs
        else:
            (xa_ref, xb_ref, xh_ref, w1_ref, b1_ref, w2_ref, b2_ref,
             w3_ref, b3_ref, *rest) = refs
        if downsampling:
            wd_ref, bd_ref, o_ref = rest
        else:
            (o_ref,) = rest

        t = pl.program_id(1)
        w1 = w1_ref[...]

        def conv1(x_bf16):            # bf16 [M, Cin_pad] -> f32 [M, P_pad]
            h = jnp.dot(x_bf16, w1, preferred_element_type=jnp.float32)
            return jnp.maximum(h + b1_ref[...], 0.0)

        # conv1 of the (<=2) halo rows; the left halo is only valid for t > 0.
        hh = conv1(xh_ref[0, 0])                         # [8, P_pad] f32
        lv = jnp.where(t > 0, 1.0, 0.0)
        hl = hh[0:1] * lv                                # h1 at x row t*TL_in - 1

        if stride == 1:
            x = x_ref[0]                                 # [TL, Cin_pad] bf16
            h1 = conv1(x)                                # [TL, P_pad]  f32
            if needs_row_mask:
                rows = t * TL + jax.lax.broadcasted_iota(jnp.int32, (TL, 1), 0)
                h1 = jnp.where(rows < L, h1, 0.0)
            rv = jnp.where((t + 1) * TL < L, 1.0, 0.0)
            hr = hh[1:2] * rv                            # h1 at x row (t+1)*TL
            if TL > 1:
                tap0 = jnp.concatenate([hl, h1[:TL - 1]], axis=0)
                tap2 = jnp.concatenate([h1[1:], hr], axis=0)
            else:
                tap0, tap2 = hl, hr
            tap1 = h1
            x_res = x                                    # residual input rows
        else:
            xa = xa_ref[0]                               # rows o -> x[stride*o]
            xb = xb_ref[0]                               # rows o -> x[stride*o + 1]
            h_a = conv1(xa)
            h_b = conv1(xb)
            # zero the (single) right conv-pad position the last valid row touches
            gb = stride * (t * TL
                           + jax.lax.broadcasted_iota(jnp.int32, (TL, 1), 0)) + 1
            h_b = jnp.where(gb < L, h_b, 0.0)
            if TL > 1:
                tap0 = jnp.concatenate([hl, h_b[:TL - 1]], axis=0)
            else:
                tap0 = hl
            tap1, tap2 = h_a, h_b
            x_res = xa                                   # x[stride*o] rows

        # conv2 (k=3, BN scale folded) as three accumulating MXU dots.
        h2 = jnp.dot(tap0.astype(jnp.bfloat16), w2_ref[0],
                     preferred_element_type=jnp.float32)
        h2 = h2 + jnp.dot(tap1.astype(jnp.bfloat16), w2_ref[1],
                          preferred_element_type=jnp.float32)
        h2 = h2 + jnp.dot(tap2.astype(jnp.bfloat16), w2_ref[2],
                          preferred_element_type=jnp.float32)
        h2 = jnp.maximum(h2 + b2_ref[...], 0.0)          # [TL, P_pad] f32

        # conv3 (1x1, BN scale folded) + BN shift
        h3 = jnp.dot(h2.astype(jnp.bfloat16), w3_ref[...],
                     preferred_element_type=jnp.float32) + b3_ref[...]

        # residual + final ReLU
        if downsampling:
            res = jnp.dot(x_res, wd_ref[...],
                          preferred_element_type=jnp.float32) + bd_ref[...]
        else:
            res = x_res.astype(jnp.float32)              # identity (bf16-quantized)

        o_ref[0] = jnp.maximum(h3 + res, 0.0).astype(jnp.bfloat16)

    return kernel


# ----------------------------------------------------------------------------
# Wrapper: layout, channel padding, BN folding, halo / stride prep, BlockSpecs
# ----------------------------------------------------------------------------
def _round_up(x, m):
    return (x + m - 1) // m * m


def _pad2(a, r, c):
    return jnp.pad(a, ((0, r - a.shape[0]), (0, c - a.shape[1])))


def _pad_row(v, c):
    return jnp.pad(v, (0, c - v.shape[0])).reshape(1, -1).astype(jnp.float32)


def bottleneck_pallas(x_ncl, params, *, stride=1, downsampling=False,
                      expansion=4, eps=1e-5, tl=512):
    if stride not in (1, 2):
        raise NotImplementedError("stride > 2 not implemented")  # TODO(synk)

    N, Cin, L = x_ncl.shape
    P = params['w1'].shape[0]
    Cout = P * expansion
    L_out = (L - 1) // stride + 1
    if not downsampling:
        assert stride == 1 and Cin == Cout, \
            "identity path requires stride==1 and in_places == places*expansion"

    Cin_pad = _round_up(Cin, 128)
    P_pad = _round_up(P, 128)
    Cout_pad = _round_up(Cout, 128)

    # --- L tiling (TL output rows per tile), gated by a VMEM footprint estimate
    def _footprint(tl_):
        n_act = 1 if stride == 1 else 2
        blk = (n_act * tl_ * Cin_pad + 8 * Cin_pad + tl_ * Cout_pad) * 2   # bf16 blocks
        wgt = ((Cin_pad * P_pad + 3 * P_pad * P_pad + P_pad * Cout_pad
                + (Cin_pad * Cout_pad if downsampling else 0)) * 2
               + 2 * (P_pad + Cout_pad) * 4)
        tmp = ((n_act + 1) * tl_ * P_pad * 4      # conv1 outputs + conv2 acc (f32)
               + 3 * tl_ * P_pad * 2              # bf16 taps
               + 2 * tl_ * Cout_pad * 4)          # conv3 + residual (f32)
        return 2 * blk + 2 * wgt + tmp            # double-buffered blocks/weights

    TL = min(tl, L_out)
    if TL < L_out:
        TL = max(8, (TL // 8) * 8)
    while TL > 8 and _footprint(TL) > 40 * 1024 * 1024:   # stay v7x-friendly
        TL = max(8, ((TL // 2) // 8) * 8)

    n_tiles = pl.cdiv(L_out, TL)
    Lo_pad = n_tiles * TL
    TL_in = TL * stride
    Lp = n_tiles * TL_in
    needs_row_mask = Lp > L

    vmem_limit = int(min(48 * 1024 * 1024,
                         max(32 * 1024 * 1024, 2 * _footprint(TL))))

    # --- activations: cast to bf16 BEFORE the layout pass, NCL -> NLC, zero-pad
    x_nlc = jnp.transpose(x_ncl.astype(jnp.bfloat16), (0, 2, 1))
    x_pad = jnp.pad(x_nlc, ((0, 0), (0, Lp - L), (0, Cin_pad - Cin)))  # [N, Lp, Cin_pad]

    # per-tile halo rows (left = row t*TL_in - 1, right = row (t+1)*TL_in; right
    # is only consumed by the stride==1 path), padded to 8 rows for alignment
    zrow = jnp.zeros((N, 1, Cin_pad), jnp.bfloat16)
    lefts = jnp.concatenate([zrow, x_pad[:, TL_in - 1:Lp - 1:TL_in, :]], axis=1)
    rights = jnp.concatenate([x_pad[:, TL_in:Lp:TL_in, :], zrow], axis=1)
    halo = jnp.stack([lefts, rights], axis=2)                 # [N, n_tiles, 2, Cin_pad]
    halo8 = jnp.pad(halo, ((0, 0), (0, 0), (0, 6), (0, 0)))   # [N, n_tiles, 8, Cin_pad]

    if stride == 1:
        acts = [x_pad]
    else:
        acts = [x_pad[:, 0::2, :], x_pad[:, 1::2, :]]         # even / odd row streams

    # --- weights: fold BN scale into bf16 weights; keep only the shift in-kernel
    def fold(stats):
        g, b, m, v = stats
        s = g / jnp.sqrt(v + eps)
        return s, b - m * s

    s1, t1 = fold(params['bn1'])
    s2, t2 = fold(params['bn2'])
    s3, t3 = fold(params['bn3'])

    w1 = _pad2((params['w1'][:, :, 0] * s1[:, None]).T, Cin_pad, P_pad).astype(jnp.bfloat16)
    w2 = jnp.stack([_pad2((params['w2'][:, :, k] * s2[:, None]).T, P_pad, P_pad)
                    for k in range(3)], axis=0).astype(jnp.bfloat16)       # [3,P,P]
    w3 = _pad2((params['w3'][:, :, 0] * s3[:, None]).T, P_pad, Cout_pad).astype(jnp.bfloat16)
    b1 = _pad_row(t1, P_pad)
    b2 = _pad_row(t2, P_pad)
    b3 = _pad_row(t3, Cout_pad)

    act_spec = pl.BlockSpec((1, TL, Cin_pad), lambda n, t: (n, t, 0))
    args = acts + [halo8, w1, b1, w2, b2, w3, b3]
    in_specs = [act_spec] * len(acts) + [
        pl.BlockSpec((1, 1, 8, Cin_pad), lambda n, t: (n, t, 0, 0)),
        pl.BlockSpec((Cin_pad, P_pad), lambda n, t: (0, 0)),
        pl.BlockSpec((1, P_pad), lambda n, t: (0, 0)),
        pl.BlockSpec((3, P_pad, P_pad), lambda n, t: (0, 0, 0)),
        pl.BlockSpec((1, P_pad), lambda n, t: (0, 0)),
        pl.BlockSpec((P_pad, Cout_pad), lambda n, t: (0, 0)),
        pl.BlockSpec((1, Cout_pad), lambda n, t: (0, 0)),
    ]
    if downsampling:
        sd, td = fold(params['bnd'])
        wd = _pad2((params['wd'][:, :, 0] * sd[:, None]).T,
                   Cin_pad, Cout_pad).astype(jnp.bfloat16)
        bd = _pad_row(td, Cout_pad)
        args += [wd, bd]
        in_specs += [pl.BlockSpec((Cin_pad, Cout_pad), lambda n, t: (0, 0)),
                     pl.BlockSpec((1, Cout_pad), lambda n, t: (0, 0))]

    kernel = _make_kernel(L, TL, stride, downsampling, needs_row_mask)
    out = pl.pallas_call(
        kernel,
        out_shape=jax.ShapeDtypeStruct((N, Lo_pad, Cout_pad), jnp.bfloat16),
        grid=(N, n_tiles),
        in_specs=in_specs,
        out_specs=pl.BlockSpec((1, TL, Cout_pad), lambda n, t: (n, t, 0)),
        compiler_params=pltpu.CompilerParams(
            dimension_semantics=("parallel", "parallel"),
            vmem_limit_bytes=vmem_limit),
    )(*args)

    # rows >= L_out / lanes >= Cout are padding garbage: slice before use.
    out = out[:, :L_out, :Cout]
    return jnp.transpose(out, (0, 2, 1)).astype(jnp.float32)   # back to NCL, f32


# ----------------------------------------------------------------------------
# Deterministic parameter init (matches the torch module's shapes)
# ----------------------------------------------------------------------------
def init_params(key, in_places, places, downsampling, expansion=4):
    cout = places * expansion
    ks = jax.random.split(key, 8)

    def bn_init(k, c):
        k1, k2, k3, k4 = jax.random.split(k, 4)
        gamma = jax.random.uniform(k1, (c,), minval=0.5, maxval=1.5)
        beta = 0.1 * jax.random.normal(k2, (c,))
        mean = 0.1 * jax.random.normal(k3, (c,))
        var = jax.random.uniform(k4, (c,), minval=0.5, maxval=1.5)
        return (gamma, beta, mean, var)

    p = {
        'w1': 0.1 * jax.random.normal(ks[0], (places, in_places, 1)),
        'bn1': bn_init(ks[1], places),
        'w2': 0.1 * jax.random.normal(ks[2], (places, places, 3)),
        'bn2': bn_init(ks[3], places),
        'w3': 0.1 * jax.random.normal(ks[4], (cout, places, 1)),
        'bn3': bn_init(ks[5], cout),
    }
    if downsampling:
        p['wd'] = 0.1 * jax.random.normal(ks[6], (cout, in_places, 1))
        p['bnd'] = bn_init(ks[7], cout)
    return jax.tree_util.tree_map(lambda a: a.astype(jnp.float32), p)


# ----------------------------------------------------------------------------
# Pure-JAX reference (mirrors the PyTorch forward, eval-mode BN, f32)
# ----------------------------------------------------------------------------
def _conv1d(x, w, stride, padding):
    return jax.lax.conv_general_dilated(
        x, w, window_strides=(stride,), padding=[(padding, padding)],
        dimension_numbers=('NCH', 'OIH', 'NCH'))


def _bn(h, stats, eps=1e-5):
    g, b, m, v = stats
    return ((h - m[None, :, None]) / jnp.sqrt(v[None, :, None] + eps)
            * g[None, :, None] + b[None, :, None])


def bottleneck_ref(x, p, stride=1, downsampling=False, eps=1e-5):
    out = jax.nn.relu(_bn(_conv1d(x, p['w1'], 1, 0), p['bn1'], eps))
    out = jax.nn.relu(_bn(_conv1d(out, p['w2'], stride, 1), p['bn2'], eps))
    out = _bn(_conv1d(out, p['w3'], 1, 0), p['bn3'], eps)
    residual = x
    if downsampling:
        residual = _bn(_conv1d(x, p['wd'], stride, 0), p['bnd'], eps)
    return jax.nn.relu(out + residual)


# ----------------------------------------------------------------------------
if __name__ == "__main__":
    key = jax.random.PRNGKey(0)
    k_x1, k_p1, k_x2, k_p2, k_x3, k_p3, k_x4, k_p4 = jax.random.split(key, 8)

    def check(out, ref):
        jax.block_until_ready(out)
        assert out.shape == ref.shape, (out.shape, ref.shape)
        err = float(jnp.max(jnp.abs(out - ref)))
        assert jnp.allclose(out, ref, atol=5e-2, rtol=5e-2), err

    # Config 1: downsampling block, two L-tiles (exercises halo handling).
    N, in_places, places, L = 2, 16, 8, 16
    x1 = jax.random.normal(k_x1, (N, in_places, L), jnp.float32)
    p1 = init_params(k_p1, in_places, places, downsampling=True)
    check(bottleneck_pallas(x1, p1, stride=1, downsampling=True, tl=8),
          bottleneck_ref(x1, p1, stride=1, downsampling=True))

    # Config 2: identity block, single L-tile.
    in_places2 = places * 4
    x2 = jax.random.normal(k_x2, (N, in_places2, L), jnp.float32)
    p2 = init_params(k_p2, in_places2, places, downsampling=False)
    check(bottleneck_pallas(x2, p2, stride=1, downsampling=False),
          bottleneck_ref(x2, p2, stride=1, downsampling=False))

    # Config 3: L not a multiple of the tile size (exercises the row mask).
    L3 = 20
    x3 = jax.random.normal(k_x3, (N, in_places, L3), jnp.float32)
    p3 = init_params(k_p3, in_places, places, downsampling=True)
    check(bottleneck_pallas(x3, p3, stride=1, downsampling=True, tl=8),
          bottleneck_ref(x3, p3, stride=1, downsampling=True))

    # Config 4: stride=2 downsampling block, odd L, multiple tiles
    # (exercises the even/odd de-interleave path + left halo + pad masking).
    L4 = 34
    x4 = jax.random.normal(k_x4, (N, in_places, L4), jnp.float32)
    p4 = init_params(k_p4, in_places, places, downsampling=True)
    check(bottleneck_pallas(x4, p4, stride=2, downsampling=True, tl=8),
          bottleneck_ref(x4, p4, stride=2, downsampling=True))

    print("KERNEL_OK")
</pallas_src>

<mosaic_0001>
module attributes {stable_mosaic.version = 11 : i64} {
  func.func @kernel(%arg0: i32, %arg1: i32, %arg2: memref<1x8x128xbf16, #tpu.memory_space<vmem>>, %arg3: memref<1x1x8x128xbf16, #tpu.memory_space<vmem>>, %arg4: memref<128x128xbf16, #tpu.memory_space<vmem>>, %arg5: memref<1x128xf32, #tpu.memory_space<vmem>>, %arg6: memref<3x128x128xbf16, #tpu.memory_space<vmem>>, %arg7: memref<1x128xf32, #tpu.memory_space<vmem>>, %arg8: memref<128x128xbf16, #tpu.memory_space<vmem>>, %arg9: memref<1x128xf32, #tpu.memory_space<vmem>>, %arg10: memref<128x128xbf16, #tpu.memory_space<vmem>>, %arg11: memref<1x128xf32, #tpu.memory_space<vmem>>, %arg12: memref<1x8x128xbf16, #tpu.memory_space<vmem>>) attributes {dimension_semantics = [#tpu.dimension_semantics<parallel>, #tpu.dimension_semantics<parallel>], iteration_bounds = array<i64: 2, 2>, scalar_prefetch = 0 : i64, scratch_operands = 0 : i64, tpu.core_type = #tpu.core_type<tc>, window_params = [{transform_indices = @transform_0, window_bounds = array<i64: 1, 8, 128>}, {transform_indices = @transform_1, window_bounds = array<i64: 1, 1, 8, 128>}, {pipeline_mode = #tpu.pipeline_mode<synchronous>, transform_indices = @transform_2, window_bounds = array<i64: 128, 128>}, {pipeline_mode = #tpu.pipeline_mode<synchronous>, transform_indices = @transform_3, window_bounds = array<i64: 1, 128>}, {pipeline_mode = #tpu.pipeline_mode<synchronous>, transform_indices = @transform_4, window_bounds = array<i64: 3, 128, 128>}, {pipeline_mode = #tpu.pipeline_mode<synchronous>, transform_indices = @transform_5, window_bounds = array<i64: 1, 128>}, {pipeline_mode = #tpu.pipeline_mode<synchronous>, transform_indices = @transform_6, window_bounds = array<i64: 128, 128>}, {pipeline_mode = #tpu.pipeline_mode<synchronous>, transform_indices = @transform_7, window_bounds = array<i64: 1, 128>}, {pipeline_mode = #tpu.pipeline_mode<synchronous>, transform_indices = @transform_8, window_bounds = array<i64: 128, 128>}, {pipeline_mode = #tpu.pipeline_mode<synchronous>, transform_indices = @transform_9, window_bounds = array<i64: 1, 128>}, {transform_indices = @transform_10, window_bounds = array<i64: 1, 8, 128>}]} {
    %c0 = arith.constant 0 : index
    %c0_0 = arith.constant 0 : index
    %0 = vector.load %arg4[%c0, %c0_0] : memref<128x128xbf16, #tpu.memory_space<vmem>>, vector<128x128xbf16>
    %c0_1 = arith.constant 0 : index
    %c0_2 = arith.constant 0 : index
    %c0_3 = arith.constant 0 : index
    %c0_4 = arith.constant 0 : index
    %1 = vector.load %arg3[%c0_1, %c0_2, %c0_3, %c0_4] : memref<1x1x8x128xbf16, #tpu.memory_space<vmem>>, vector<1x1x8x128xbf16>
    %2 = vector.shape_cast %1 : vector<1x1x8x128xbf16> to vector<8x128xbf16>
    %cst = arith.constant dense<0.000000e+00> : vector<8x128xf32>
    %3 = tpu.matmul %2, %0, %cst {dimension_numbers = #tpu.dot_dimension_numbers<[1], [0], [0], [1], [0, 0, 1, 1], [], []>} : vector<8x128xbf16>, vector<128x128xbf16>, vector<8x128xf32> -> vector<8x128xf32>
    %c0_5 = arith.constant 0 : index
    %c0_6 = arith.constant 0 : index
    %4 = vector.load %arg5[%c0_5, %c0_6] : memref<1x128xf32, #tpu.memory_space<vmem>>, vector<1x128xf32>
    %5 = vector.broadcast %4 : vector<1x128xf32> to vector<8x128xf32>
    %6 = arith.addf %3, %5 : vector<8x128xf32>
    %cst_7 = arith.constant 0.000000e+00 : f32
    %7 = vector.broadcast %cst_7 : f32 to vector<8x128xf32>
    %8 = arith.maximumf %6, %7 : vector<8x128xf32>
    %c0_i32 = arith.constant 0 : i32
    %9 = arith.cmpi sgt, %arg1, %c0_i32 : i32
    %cst_8 = arith.constant 1.000000e+00 : f32
    %cst_9 = arith.constant 0.000000e+00 : f32
    %10 = arith.select %9, %cst_8, %cst_9 : f32
    %11 = vector.extract_strided_slice %8 {offsets = [0, 0], sizes = [1, 128], strides = [1, 1]} : vector<8x128xf32> to vector<1x128xf32>
    %12 = vector.broadcast %10 : f32 to vector<1x128xf32>
    %13 = arith.mulf %11, %12 : vector<1x128xf32>
    %c0_10 = arith.constant 0 : index
    %c0_11 = arith.constant 0 : index
    %c0_12 = arith.constant 0 : index
    %14 = vector.load %arg2[%c0_10, %c0_11, %c0_12] : memref<1x8x128xbf16, #tpu.memory_space<vmem>>, vector<1x8x128xbf16>
    %15 = vector.shape_cast %14 : vector<1x8x128xbf16> to vector<8x128xbf16>
    %cst_13 = arith.constant dense<0.000000e+00> : vector<8x128xf32>
    %16 = tpu.matmul %15, %0, %cst_13 {dimension_numbers = #tpu.dot_dimension_numbers<[1], [0], [0], [1], [0, 0, 1, 1], [], []>} : vector<8x128xbf16>, vector<128x128xbf16>, vector<8x128xf32> -> vector<8x128xf32>
    %c0_14 = arith.constant 0 : index
    %c0_15 = arith.constant 0 : index
    %17 = vector.load %arg5[%c0_14, %c0_15] : memref<1x128xf32, #tpu.memory_space<vmem>>, vector<1x128xf32>
    %18 = vector.broadcast %17 : vector<1x128xf32> to vector<8x128xf32>
    %19 = arith.addf %16, %18 : vector<8x128xf32>
    %cst_16 = arith.constant 0.000000e+00 : f32
    %20 = vector.broadcast %cst_16 : f32 to vector<8x128xf32>
    %21 = arith.maximumf %19, %20 : vector<8x128xf32>
    %c1_i32 = arith.constant 1 : i32
    %22 = arith.addi %arg1, %c1_i32 : i32
    %c8_i32 = arith.constant 8 : i32
    %23 = arith.muli %22, %c8_i32 : i32
    %c16_i32 = arith.constant 16 : i32
    %24 = arith.cmpi slt, %23, %c16_i32 : i32
    %cst_17 = arith.constant 1.000000e+00 : f32
    %cst_18 = arith.constant 0.000000e+00 : f32
    %25 = arith.select %24, %cst_17, %cst_18 : f32
    %26 = vector.extract_strided_slice %8 {offsets = [1, 0], sizes = [1, 128], strides = [1, 1]} : vector<8x128xf32> to vector<1x128xf32>
    %27 = vector.broadcast %25 : f32 to vector<1x128xf32>
    %28 = arith.mulf %26, %27 : vector<1x128xf32>
    %29 = vector.extract_strided_slice %21 {offsets = [0, 0], sizes = [7, 128], strides = [1, 1]} : vector<8x128xf32> to vector<7x128xf32>
    %30 = tpu.concatenate %13, %29 in 0 : vector<1x128xf32>, vector<7x128xf32> -> vector<8x128xf32>
    %31 = vector.extract_strided_slice %21 {offsets = [1, 0], sizes = [7, 128], strides = [1, 1]} : vector<8x128xf32> to vector<7x128xf32>
    %32 = tpu.concatenate %31, %28 in 0 : vector<7x128xf32>, vector<1x128xf32> -> vector<8x128xf32>
    %33 = arith.truncf %30 : vector<8x128xf32> to vector<8x128xbf16>
    %c0_19 = arith.constant 0 : index
    %c0_20 = arith.constant 0 : index
    %c0_21 = arith.constant 0 : index
    %34 = vector.load %arg6[%c0_19, %c0_20, %c0_21] : memref<3x128x128xbf16, #tpu.memory_space<vmem>>, vector<1x128x128xbf16>
    %35 = vector.shape_cast %34 : vector<1x128x128xbf16> to vector<128x128xbf16>
    %cst_22 = arith.constant dense<0.000000e+00> : vector<8x128xf32>
    %36 = tpu.matmul %33, %35, %cst_22 {dimension_numbers = #tpu.dot_dimension_numbers<[1], [0], [0], [1], [0, 0, 1, 1], [], []>} : vector<8x128xbf16>, vector<128x128xbf16>, vector<8x128xf32> -> vector<8x128xf32>
    %37 = arith.truncf %21 : vector<8x128xf32> to vector<8x128xbf16>
    %c1 = arith.constant 1 : index
    %c0_23 = arith.constant 0 : index
    %c0_24 = arith.constant 0 : index
    %38 = vector.load %arg6[%c1, %c0_23, %c0_24] : memref<3x128x128xbf16, #tpu.memory_space<vmem>>, vector<1x128x128xbf16>
    %39 = vector.shape_cast %38 : vector<1x128x128xbf16> to vector<128x128xbf16>
    %cst_25 = arith.constant dense<0.000000e+00> : vector<8x128xf32>
    %40 = tpu.matmul %37, %39, %cst_25 {dimension_numbers = #tpu.dot_dimension_numbers<[1], [0], [0], [1], [0, 0, 1, 1], [], []>} : vector<8x128xbf16>, vector<128x128xbf16>, vector<8x128xf32> -> vector<8x128xf32>
    %41 = arith.addf %36, %40 : vector<8x128xf32>
    %42 = arith.truncf %32 : vector<8x128xf32> to vector<8x128xbf16>
    %c2 = arith.constant 2 : index
    %c0_26 = arith.constant 0 : index
    %c0_27 = arith.constant 0 : index
    %43 = vector.load %arg6[%c2, %c0_26, %c0_27] : memref<3x128x128xbf16, #tpu.memory_space<vmem>>, vector<1x128x128xbf16>
    %44 = vector.shape_cast %43 : vector<1x128x128xbf16> to vector<128x128xbf16>
    %cst_28 = arith.constant dense<0.000000e+00> : vector<8x128xf32>
    %45 = tpu.matmul %42, %44, %cst_28 {dimension_numbers = #tpu.dot_dimension_numbers<[1], [0], [0], [1], [0, 0, 1, 1], [], []>} : vector<8x128xbf16>, vector<128x128xbf16>, vector<8x128xf32> -> vector<8x128xf32>
    %46 = arith.addf %41, %45 : vector<8x128xf32>
    %c0_29 = arith.constant 0 : index
    %c0_30 = arith.constant 0 : index
    %47 = vector.load %arg7[%c0_29, %c0_30] : memref<1x128xf32, #tpu.memory_space<vmem>>, vector<1x128xf32>
    %48 = vector.broadcast %47 : vector<1x128xf32> to vector<8x128xf32>
    %49 = arith.addf %46, %48 : vector<8x128xf32>
    %cst_31 = arith.constant 0.000000e+00 : f32
    %50 = vector.broadcast %cst_31 : f32 to vector<8x128xf32>
    %51 = arith.maximumf %49, %50 : vector<8x128xf32>
    %52 = arith.truncf %51 : vector<8x128xf32> to vector<8x128xbf16>
    %c0_32 = arith.constant 0 : index
    %c0_33 = arith.constant 0 : index
    %53 = vector.load %arg8[%c0_32, %c0_33] : memref<128x128xbf16, #tpu.memory_space<vmem>>, vector<128x128xbf16>
    %cst_34 = arith.constant dense<0.000000e+00> : vector<8x128xf32>
    %54 = tpu.matmul %52, %53, %cst_34 {dimension_numbers = #tpu.dot_dimension_numbers<[1], [0], [0], [1], [0, 0, 1, 1], [], []>} : vector<8x128xbf16>, vector<128x128xbf16>, vector<8x128xf32> -> vector<8x128xf32>
    %c0_35 = arith.constant 0 : index
    %c0_36 = arith.constant 0 : index
    %55 = vector.load %arg9[%c0_35, %c0_36] : memref<1x128xf32, #tpu.memory_space<vmem>>, vector<1x128xf32>
    %56 = vector.broadcast %55 : vector<1x128xf32> to vector<8x128xf32>
    %57 = arith.addf %54, %56 : vector<8x128xf32>
    %c0_37 = arith.constant 0 : index
    %c0_38 = arith.constant 0 : index
    %58 = vector.load %arg10[%c0_37, %c0_38] : memref<128x128xbf16, #tpu.memory_space<vmem>>, vector<128x128xbf16>
    %cst_39 = arith.constant dense<0.000000e+00> : vector<8x128xf32>
    %59 = tpu.matmul %15, %58, %cst_39 {dimension_numbers = #tpu.dot_dimension_numbers<[1], [0], [0], [1], [0, 0, 1, 1], [], []>} : vector<8x128xbf16>, vector<128x128xbf16>, vector<8x128xf32> -> vector<8x128xf32>
    %c0_40 = arith.constant 0 : index
    %c0_41 = arith.constant 0 : index
    %60 = vector.load %arg11[%c0_40, %c0_41] : memref<1x128xf32, #tpu.memory_space<vmem>>, vector<1x128xf32>
    %61 = vector.broadcast %60 : vector<1x128xf32> to vector<8x128xf32>
    %62 = arith.addf %59, %61 : vector<8x128xf32>
    %63 = arith.addf %57, %62 : vector<8x128xf32>
    %cst_42 = arith.constant 0.000000e+00 : f32
    %64 = vector.broadcast %cst_42 : f32 to vector<8x128xf32>
    %65 = arith.maximumf %63, %64 : vector<8x128xf32>
    %66 = arith.truncf %65 : vector<8x128xf32> to vector<8x128xbf16>
    %c0_43 = arith.constant 0 : index
    %c0_44 = arith.constant 0 : index
    %c0_45 = arith.constant 0 : index
    %67 = vector.load %arg12[%c0_43, %c0_44, %c0_45] : memref<1x8x128xbf16, #tpu.memory_space<vmem>>, vector<1x8x128xbf16>
    %68 = vector.shape_cast %67 : vector<1x8x128xbf16> to vector<8x128xbf16>
    %69 = vector.shape_cast %66 : vector<8x128xbf16> to vector<1x8x128xbf16>
    tpu.vector_store %arg12[%c0_43, %c0_44, %c0_45], %69 {strides = array<i32>} : memref<1x8x128xbf16, #tpu.memory_space<vmem>>, vector<1x8x128xbf16>,
    return
  }
  func.func @transform_0(%arg0: i32, %arg1: i32) -> (i32, i32, i32) {
    %c0_i32 = arith.constant 0 : i32
    %c0_i32_0 = arith.constant 0 : i32
    return %arg0, %arg1, %c0_i32 : i32, i32, i32
  }
  func.func @transform_1(%arg0: i32, %arg1: i32) -> (i32, i32, i32, i32) {
    %c0_i32 = arith.constant 0 : i32
    %c0_i32_0 = arith.constant 0 : i32
    %c0_i32_1 = arith.constant 0 : i32
    return %arg0, %arg1, %c0_i32, %c0_i32_0 : i32, i32, i32, i32
  }
  func.func @transform_2(%arg0: i32, %arg1: i32) -> (i32, i32) {
    %c0_i32 = arith.constant 0 : i32
    %c0_i32_0 = arith.constant 0 : i32
    %c0_i32_1 = arith.constant 0 : i32
    return %c0_i32, %c0_i32_0 : i32, i32
  }
  func.func @transform_3(%arg0: i32, %arg1: i32) -> (i32, i32) {
    %c0_i32 = arith.constant 0 : i32
    %c0_i32_0 = arith.constant 0 : i32
    %c0_i32_1 = arith.constant 0 : i32
    return %c0_i32, %c0_i32_0 : i32, i32
  }
  func.func @transform_4(%arg0: i32, %arg1: i32) -> (i32, i32, i32) {
    %c0_i32 = arith.constant 0 : i32
    %c0_i32_0 = arith.constant 0 : i32
    %c0_i32_1 = arith.constant 0 : i32
    %c0_i32_2 = arith.constant 0 : i32
    return %c0_i32, %c0_i32_0, %c0_i32_1 : i32, i32, i32
  }
  func.func @transform_5(%arg0: i32, %arg1: i32) -> (i32, i32) {
    %c0_i32 = arith.constant 0 : i32
    %c0_i32_0 = arith.constant 0 : i32
    %c0_i32_1 = arith.constant 0 : i32
    return %c0_i32, %c0_i32_0 : i32, i32
  }
  func.func @transform_6(%arg0: i32, %arg1: i32) -> (i32, i32) {
    %c0_i32 = arith.constant 0 : i32
    %c0_i32_0 = arith.constant 0 : i32
    %c0_i32_1 = arith.constant 0 : i32
    return %c0_i32, %c0_i32_0 : i32, i32
  }
  func.func @transform_7(%arg0: i32, %arg1: i32) -> (i32, i32) {
    %c0_i32 = arith.constant 0 : i32
    %c0_i32_0 = arith.constant 0 : i32
    %c0_i32_1 = arith.constant 0 : i32
    return %c0_i32, %c0_i32_0 : i32, i32
  }
  func.func @transform_8(%arg0: i32, %arg1: i32) -> (i32, i32) {
    %c0_i32 = arith.constant 0 : i32
    %c0_i32_0 = arith.constant 0 : i32
    %c0_i32_1 = arith.constant 0 : i32
    return %c0_i32, %c0_i32_0 : i32, i32
  }
  func.func @transform_9(%arg0: i32, %arg1: i32) -> (i32, i32) {
    %c0_i32 = arith.constant 0 : i32
    %c0_i32_0 = arith.constant 0 : i32
    %c0_i32_1 = arith.constant 0 : i32
    return %c0_i32, %c0_i32_0 : i32, i32
  }
  func.func @transform_10(%arg0: i32, %arg1: i32) -> (i32, i32, i32) {
    %c0_i32 = arith.constant 0 : i32
    %c0_i32_0 = arith.constant 0 : i32
    return %arg0, %arg1, %c0_i32 : i32, i32, i32
  }
}

</mosaic_0001>

<llo_original>
// kernel: tpu_custom_call.1
$region0: #{tpu_custom_call.1}
  #allocation0 [shape = 'u32[]', space=smem, size = 0x4, offset = 0x4, fixed_abs, tag = 'smem constant byte address 0x4 - core index']
  #allocation1 [shape = 'u32[144,128]{1,0:T(1,128)}', space=vmem, size = 0x12000, scoped, tag = 'internal scratch']
  %s0 = inlined_call_operand.hbm [shape: bf16[2,16,128], index: 0, kind: input, shape index: {}]
  %s1 = inlined_call_operand.hbm [shape: bf16[2,2,8,128], index: 1, kind: input, shape index: {}]
  %s2 = inlined_call_operand.hbm [shape: bf16[128,128], index: 2, kind: input, shape index: {}]
  %s3 = inlined_call_operand.vmem [shape: f32[1,128], index: 3, kind: input, shape index: {}]
  %s4 = inlined_call_operand.hbm [shape: bf16[3,128,128], index: 4, kind: input, shape index: {}]
  %s5 = inlined_call_operand.vmem [shape: f32[1,128], index: 5, kind: input, shape index: {}]
  %s6 = inlined_call_operand.hbm [shape: bf16[128,128], index: 6, kind: input, shape index: {}]
  %s7 = inlined_call_operand.vmem [shape: f32[1,128], index: 7, kind: input, shape index: {}]
  %s8 = inlined_call_operand.hbm [shape: bf16[128,128], index: 8, kind: input, shape index: {}]
  %s9 = inlined_call_operand.vmem [shape: f32[1,128], index: 9, kind: input, shape index: {}]
  %s10 = inlined_call_operand.hbm [shape: bf16[2,16,128], index: 10, kind: output, shape index: {}]
  %s11 = sld [smem:[#allocation0]]
  $region97: #{tpu_custom_call.1} parent=0
    _
  %s13 = ssub.s32 1, %s11
  %s14 = scalar_select 0, %s13, %s11
  $region1: #{tpu_custom_call.1} parent=0
    #allocation2 [shape = 'u8[4096]{0}', space=vmem, size = 0x1000, scoped, tag = 'input window, operand 0']
    #allocation3 [shape = 's32[2]{0}', space=sflag, size = 0x8, scoped, tag = 'scoped memory for tpu_custom_call.1']
    #allocation4 [shape = 's32[2]{0}', space=sflag, size = 0x8, scoped, tag = 'scoped memory for tpu_custom_call.1']
    #allocation5 [shape = 'u8[4096]{0}', space=vmem, size = 0x1000, scoped, tag = 'input window, operand 1']
    #allocation6 [shape = 's32[2]{0}', space=sflag, size = 0x8, scoped, tag = 'scoped memory for tpu_custom_call.1']
    #allocation7 [shape = 'u8[32768]{0}', space=vmem, size = 0x8000, scoped, tag = 'input window, operand 2, single buffered']
    #allocation8 [shape = 'u8[98304]{0}', space=vmem, size = 0x18000, scoped, tag = 'input window, operand 4, single buffered']
    #allocation9 [shape = 's32[1]{0}', space=sflag, size = 0x4, scoped, tag = 'scoped memory for tpu_custom_call.1']
    #allocation10 [shape = 'u8[32768]{0}', space=vmem, size = 0x8000, scoped, tag = 'input window, operand 6, single buffered']
    #allocation11 [shape = 'u8[32768]{0}', space=vmem, size = 0x8000, scoped, tag = 'input window, operand 8, single buffered']
    #allocation12 [shape = 's32[1]{0}', space=sflag, size = 0x4, scoped, tag = 'scoped memory for tpu_custom_call.1']
    #allocation13 [shape = 'u8[4096]{0}', space=vmem, size = 0x1000, scoped, tag = 'output window, operand 0']
    %15 = vsyncpa [#allocation3], 0
    %s16 = scalar_lea.sflag [#allocation3], 1
    %17 = vsyncpa %s16, 0
    %18 = vsyncpa [#allocation6], 0
    %s19 = scalar_lea.sflag [#allocation6], 1
    %20 = vsyncpa %s19, 0
    %21 = vsyncpa [#allocation9], 0
    %22 = vsyncpa [#allocation12], 0
    %23 = vsyncpa [#allocation4], 0
    %s24 = scalar_lea.sflag [#allocation4], 1
    %25 = vsyncpa %s24, 0
    loop: start=0, step=1, limit=6
    $region2: #{tpu_custom_call.1} parent=1 // loop_pre_header
      _
    $region3: #{tpu_custom_call.1} parent=1 // loop_header
      %s27 = sphi 0, %s31
      %p28 = scmp.ge.s32.totalorder %s27, 6
      %s34 = sphi 0, %s46
      %s35 = sphi 0, %s42
      %s36 = sphi 0, %s34
      %s37 = sphi 0, %s35
      %s38 = sphi 0, %s36
      %s39 = sphi 0, %s37
      %s51 = sphi 0, %s53
      %s54 = sphi 0, %s51
      %s55 = sphi 0, %s54
      %s71 = sphi 0, %s55
      %s79 = sphi 0, %s81
      %s82 = sphi 0, %s79
      %s83 = sphi 0, %s82
      %s99 = sphi 0, %s83
      %s103 = sphi 0, %s103
      %s105 = sphi 0, %s103
      %s106 = sphi 0, %s105
      %s120 = sphi 0, %s106
      %s124 = sphi 0, %s124
      %s126 = sphi 0, %s124
      %s127 = sphi 0, %s126
      %s141 = sphi 0, %s127
      %s145 = sphi 0, %s145
      %s147 = sphi 0, %s145
      %s148 = sphi 0, %s147
      %s162 = sphi 0, %s148
      %s166 = sphi 0, %s166
      %s168 = sphi 0, %s166
      %s169 = sphi 0, %s168
      %s183 = sphi 0, %s169
      %s187 = sphi 0, %s187
      %s189 = sphi 0, %s187
      %s190 = sphi 0, %s189
      %s204 = sphi 0, %s190
      %s208 = sphi 0, %s208
      %s210 = sphi 0, %s208
      %s211 = sphi 0, %s210
      %s225 = sphi 0, %s211
      %s229 = sphi 0, %s229
      %s231 = sphi 0, %s229
      %s232 = sphi 0, %s231
      %s246 = sphi 0, %s232
      %s250 = sphi 0, %s250
      %s252 = sphi 0, %s250
      %s253 = sphi 0, %s252
      %s267 = sphi 0, %s253
      %s275 = sphi 0, %s277
      %s278 = sphi 0, %s275
      %s279 = sphi 0, %s278
      %s295 = sphi 0, %s279
    $region4: #{tpu_custom_call.1} parent=1 // loop_header_branch
      %30 = sbr.rel (%p28) target = $region8
    $region5: #{tpu_custom_call.1} parent=1 // loop_body
      %s32 = ssub.s32 %s27, 1
      %s33 = ssub.s32 %s27, 2
      %s40 = sadd.s32 1, %s35
      %p41 = scmp.ge.s32.totalorder %s40, 2
      %s42 = scalar_select %p41, 0, %s40
      %s43 = sadd.s32 1, %s34
      %s44 = scalar_select %p41, %s43, %s34
      %p45 = scmp.ge.s32.totalorder %s44, 2
      %s46 = scalar_select %p45, 0, %s44
      %s47 = ssub.s32 %s34, %s46
      %s48 = ssub.s32 %s35, %s42
      %s49 = sor.u32 %s47, %s48
      %p50 = scmp.eq.s32.totalorder %s49, 0
      %s52 = sadd.s32 %s51, 1
      %s53 = scalar_select %p50, %s51, %s52
      %p56 = pneg %p50
      %p57 = scmp.eq.s32.totalorder %s27, 3
      %p58 = por %p56, %p57
      %p59 = scmp.ne.s32.totalorder %s51, %s54
      %p60 = scmp.eq.s32.totalorder %s27, 0
      %p61 = por %p59, %p60
      %p62 = scmp.ne.s32.totalorder %s51, %s54
      %p63 = scmp.eq.s32.totalorder %s32, 3
      %p64 = por %p62, %p63
      %p65 = scmp.ne.s32.totalorder %s54, %s55
      %p66 = scmp.eq.s32.totalorder %s32, 0
      %p67 = por %p65, %p66
      %p68 = scmp.ne.s32.totalorder %s54, %s55
      %p69 = scmp.eq.s32.totalorder %s33, 3
      %p70 = por %p68, %p69
      %p72 = scmp.ne.s32.totalorder %s55, %s71
      %p73 = scmp.eq.s32.totalorder %s33, 0
      %p74 = por %p72, %p73
      %s75 = ssub.s32 %s34, %s46
      %s76 = ssub.s32 %s35, %s42
      %s77 = sor.u32 %s75, %s76
      %p78 = scmp.eq.s32.totalorder %s77, 0
      %s80 = sadd.s32 %s79, 1
      %s81 = scalar_select %p78, %s79, %s80
      %p84 = pneg %p78
      %p85 = scmp.eq.s32.totalorder %s27, 3
      %p86 = por %p84, %p85
      %p87 = scmp.ne.s32.totalorder %s79, %s82
      %p88 = scmp.eq.s32.totalorder %s27, 0
      %p89 = por %p87, %p88
      %p90 = scmp.ne.s32.totalorder %s79, %s82
      %p91 = scmp.eq.s32.totalorder %s32, 3
      %p92 = por %p90, %p91
      %p93 = scmp.ne.s32.totalorder %s82, %s83
      %p94 = scmp.eq.s32.totalorder %s32, 0
      %p95 = por %p93, %p94
      %p96 = scmp.ne.s32.totalorder %s82, %s83
      %p97 = scmp.eq.s32.totalorder %s33, 3
      %p98 = por %p96, %p97
      %p100 = scmp.ne.s32.totalorder %s83, %s99
      %p101 = scmp.eq.s32.totalorder %s33, 0
      %p102 = por %p100, %p101
      %s104 = sadd.s32 %s103, 1
      %p107 = scmp.eq.s32.totalorder %s27, 3
      %p108 = scmp.ne.s32.totalorder %s103, %s105
      %p109 = scmp.eq.s32.totalorder %s27, 0
      %p110 = por %p108, %p109
      %p111 = scmp.ne.s32.totalorder %s103, %s105
      %p112 = scmp.eq.s32.totalorder %s32, 3
      %p113 = por %p111, %p112
      %p114 = scmp.ne.s32.totalorder %s105, %s106
      %p115 = scmp.eq.s32.totalorder %s32, 0
      %p116 = por %p114, %p115
      %p117 = scmp.ne.s32.totalorder %s105, %s106
      %p118 = scmp.eq.s32.totalorder %s33, 3
      %p119 = por %p117, %p118
      %p121 = scmp.ne.s32.totalorder %s106, %s120
      %p122 = scmp.eq.s32.totalorder %s33, 0
      %p123 = por %p121, %p122
      %s125 = sadd.s32 %s124, 1
      %p128 = scmp.eq.s32.totalorder %s27, 3
      %p129 = scmp.ne.s32.totalorder %s124, %s126
      %p130 = scmp.eq.s32.totalorder %s27, 0
      %p131 = por %p129, %p130
      %p132 = scmp.ne.s32.totalorder %s124, %s126
      %p133 = scmp.eq.s32.totalorder %s32, 3
      %p134 = por %p132, %p133
      %p135 = scmp.ne.s32.totalorder %s126, %s127
      %p136 = scmp.eq.s32.totalorder %s32, 0
      %p137 = por %p135, %p136
      %p138 = scmp.ne.s32.totalorder %s126, %s127
      %p139 = scmp.eq.s32.totalorder %s33, 3
      %p140 = por %p138, %p139
      %p142 = scmp.ne.s32.totalorder %s127, %s141
      %p143 = scmp.eq.s32.totalorder %s33, 0
      %p144 = por %p142, %p143
      %s146 = sadd.s32 %s145, 1
      %p149 = scmp.eq.s32.totalorder %s27, 3
      %p150 = scmp.ne.s32.totalorder %s145, %s147
      %p151 = scmp.eq.s32.totalorder %s27, 0
      %p152 = por %p150, %p151
      %p153 = scmp.ne.s32.totalorder %s145, %s147
      %p154 = scmp.eq.s32.totalorder %s32, 3
      %p155 = por %p153, %p154
      %p156 = scmp.ne.s32.totalorder %s147, %s148
      %p157 = scmp.eq.s32.totalorder %s32, 0
      %p158 = por %p156, %p157
      %p159 = scmp.ne.s32.totalorder %s147, %s148
      %p160 = scmp.eq.s32.totalorder %s33, 3
      %p161 = por %p159, %p160
      %p163 = scmp.ne.s32.totalorder %s148, %s162
      %p164 = scmp.eq.s32.totalorder %s33, 0
      %p165 = por %p163, %p164
      %s167 = sadd.s32 %s166, 1
      %p170 = scmp.eq.s32.totalorder %s27, 3
      %p171 = scmp.ne.s32.totalorder %s166, %s168
      %p172 = scmp.eq.s32.totalorder %s27, 0
      %p173 = por %p171, %p172
      %p174 = scmp.ne.s32.totalorder %s166, %s168
      %p175 = scmp.eq.s32.totalorder %s32, 3
      %p176 = por %p174, %p175
      %p177 = scmp.ne.s32.totalorder %s168, %s169
      %p178 = scmp.eq.s32.totalorder %s32, 0
      %p179 = por %p177, %p178
      %p180 = scmp.ne.s32.totalorder %s168, %s169
      %p181 = scmp.eq.s32.totalorder %s33, 3
      %p182 = por %p180, %p181
      %p184 = scmp.ne.s32.totalorder %s169, %s183
      %p185 = scmp.eq.s32.totalorder %s33, 0
      %p186 = por %p184, %p185
      %s188 = sadd.s32 %s187, 1
      %p191 = scmp.eq.s32.totalorder %s27, 3
      %p192 = scmp.ne.s32.totalorder %s187, %s189
      %p193 = scmp.eq.s32.totalorder %s27, 0
      %p194 = por %p192, %p193
      %p195 = scmp.ne.s32.totalorder %s187, %s189
      %p196 = scmp.eq.s32.totalorder %s32, 3
      %p197 = por %p195, %p196
      %p198 = scmp.ne.s32.totalorder %s189, %s190
      %p199 = scmp.eq.s32.totalorder %s32, 0
      %p200 = por %p198, %p199
      %p201 = scmp.ne.s32.totalorder %s189, %s190
      %p202 = scmp.eq.s32.totalorder %s33, 3
      %p203 = por %p201, %p202
      %p205 = scmp.ne.s32.totalorder %s190, %s204
      %p206 = scmp.eq.s32.totalorder %s33, 0
      %p207 = por %p205, %p206
      %s209 = sadd.s32 %s208, 1
      %p212 = scmp.eq.s32.totalorder %s27, 3
      %p213 = scmp.ne.s32.totalorder %s208, %s210
      %p214 = scmp.eq.s32.totalorder %s27, 0
      %p215 = por %p213, %p214
      %p216 = scmp.ne.s32.totalorder %s208, %s210
      %p217 = scmp.eq.s32.totalorder %s32, 3
      %p218 = por %p216, %p217
      %p219 = scmp.ne.s32.totalorder %s210, %s211
      %p220 = scmp.eq.s32.totalorder %s32, 0
      %p221 = por %p219, %p220
      %p222 = scmp.ne.s32.totalorder %s210, %s211
      %p223 = scmp.eq.s32.totalorder %s33, 3
      %p224 = por %p222, %p223
      %p226 = scmp.ne.s32.totalorder %s211, %s225
      %p227 = scmp.eq.s32.totalorder %s33, 0
      %p228 = por %p226, %p227
      %s230 = sadd.s32 %s229, 1
      %p233 = scmp.eq.s32.totalorder %s27, 3
      %p234 = scmp.ne.s32.totalorder %s229, %s231
      %p235 = scmp.eq.s32.totalorder %s27, 0
      %p236 = por %p234, %p235
      %p237 = scmp.ne.s32.totalorder %s229, %s231
      %p238 = scmp.eq.s32.totalorder %s32, 3
      %p239 = por %p237, %p238
      %p240 = scmp.ne.s32.totalorder %s231, %s232
      %p241 = scmp.eq.s32.totalorder %s32, 0
      %p242 = por %p240, %p241
      %p243 = scmp.ne.s32.totalorder %s231, %s232
      %p244 = scmp.eq.s32.totalorder %s33, 3
      %p245 = por %p243, %p244
      %p247 = scmp.ne.s32.totalorder %s232, %s246
      %p248 = scmp.eq.s32.totalorder %s33, 0
      %p249 = por %p247, %p248
      %s251 = sadd.s32 %s250, 1
      %p254 = scmp.eq.s32.totalorder %s27, 3
      %p255 = scmp.ne.s32.totalorder %s250, %s252
      %p256 = scmp.eq.s32.totalorder %s27, 0
      %p257 = por %p255, %p256
      %p258 = scmp.ne.s32.totalorder %s250, %s252
      %p259 = scmp.eq.s32.totalorder %s32, 3
      %p260 = por %p258, %p259
      %p261 = scmp.ne.s32.totalorder %s252, %s253
      %p262 = scmp.eq.s32.totalorder %s32, 0
      %p263 = por %p261, %p262
      %p264 = scmp.ne.s32.totalorder %s252, %s253
      %p265 = scmp.eq.s32.totalorder %s33, 3
      %p266 = por %p264, %p265
      %p268 = scmp.ne.s32.totalorder %s253, %s267
      %p269 = scmp.eq.s32.totalorder %s33, 0
      %p270 = por %p268, %p269
      %s271 = ssub.s32 %s34, %s46
      %s272 = ssub.s32 %s35, %s42
      %s273 = sor.u32 %s271, %s272
      %p274 = scmp.eq.s32.totalorder %s273, 0
      %s276 = sadd.s32 %s275, 1
      %s277 = scalar_select %p274, %s275, %s276
      %p280 = pneg %p274
      %p281 = scmp.eq.s32.totalorder %s27, 3
      %p282 = por %p280, %p281
      %p283 = scmp.ne.s32.totalorder %s275, %s278
      %p284 = scmp.eq.s32.totalorder %s27, 0
      %p285 = por %p283, %p284
      %p286 = scmp.ne.s32.totalorder %s275, %s278
      %p287 = scmp.eq.s32.totalorder %s32, 3
      %p288 = por %p286, %p287
      %p289 = scmp.ne.s32.totalorder %s278, %s279
      %p290 = scmp.eq.s32.totalorder %s32, 0
      %p291 = por %p289, %p290
      %p292 = scmp.ne.s32.totalorder %s278, %s279
      %p293 = scmp.eq.s32.totalorder %s33, 3
      %p294 = por %p292, %p293
      %p296 = scmp.ne.s32.totalorder %s279, %s295
      %p297 = scmp.eq.s32.totalorder %s33, 0
      %p298 = por %p296, %p297
      %p299 = scmp.le.s32.totalorder 1, %s27
      %p300 = scmp.lt.s32.totalorder %s27, 5
      %p301 = pnand %p299, %p300
      %p302 = pneg %p301
      // Predicated region
      $region9: #{tpu_custom_call.1} parent=5 // pred_check
        _
      $region10: #{tpu_custom_call.1} parent=5 // pred_check_branch
        %304 = sbr.rel (%p301) target = $region12
      $region11: #{tpu_custom_call.1} parent=5 // pred_region
        %s305 = ssub.s32 %s27, 1
        // Predicated region
        $region13: #{tpu_custom_call.1} parent=11 // pred_check
          %p306 = pneg %p116
        $region14: #{tpu_custom_call.1} parent=11 // pred_check_branch
          %308 = sbr.rel (%p306) target = $region16
        $region15: #{tpu_custom_call.1} parent=11 // pred_region
          %s310 = ssub.s32 1024, 1024
          %311 = vsyncadd [#allocation6], %s310
          %s312 = sshll.u32 [#allocation7], 4
          %s313 = int_to_ptr.vmem [resolvable:$true] %s312
          %318 = dma.hbm_to_vmem [thread:$0]  %s2, 1024, %s313, [#allocation6], 64, 64, 4
        $region16: #{tpu_custom_call.1} parent=11 // pred_fallthru
          _
        // Predicated region
        $region17: #{tpu_custom_call.1} parent=11 // pred_check
          %p319 = pneg %p137
        $region18: #{tpu_custom_call.1} parent=11 // pred_check_branch
          %321 = sbr.rel (%p319) target = $region20
        $region19: #{tpu_custom_call.1} parent=11 // pred_region
          _
        $region20: #{tpu_custom_call.1} parent=11 // pred_fallthru
          _
        // Predicated region
        $region21: #{tpu_custom_call.1} parent=11 // pred_check
          %p322 = pneg %p158
        $region22: #{tpu_custom_call.1} parent=11 // pred_check_branch
          %324 = sbr.rel (%p322) target = $region24
        $region23: #{tpu_custom_call.1} parent=11 // pred_region
          %s326 = ssub.s32 3072, 3072
          %327 = vsyncadd [#allocation9], %s326
          %s328 = sshll.u32 [#allocation8], 4
          %s329 = int_to_ptr.vmem [resolvable:$true] %s328
          %334 = dma.hbm_to_vmem [thread:$0]  %s4, 3072, %s329, [#allocation9], 64, 64, 4
        $region24: #{tpu_custom_call.1} parent=11 // pred_fallthru
          _
        // Predicated region
        $region25: #{tpu_custom_call.1} parent=11 // pred_check
          %p335 = pneg %p179
        $region26: #{tpu_custom_call.1} parent=11 // pred_check_branch
          %337 = sbr.rel (%p335) target = $region28
        $region27: #{tpu_custom_call.1} parent=11 // pred_region
          _
        $region28: #{tpu_custom_call.1} parent=11 // pred_fallthru
          _
        // Predicated region
        $region29: #{tpu_custom_call.1} parent=11 // pred_check
          %p338 = pneg %p200
        $region30: #{tpu_custom_call.1} parent=11 // pred_check_branch
          %340 = sbr.rel (%p338) target = $region32
        $region31: #{tpu_custom_call.1} parent=11 // pred_region
          %s342 = ssub.s32 1024, 1024
          %343 = vsyncadd [#allocation9], %s342
          %s344 = sshll.u32 [#allocation10], 4
          %s345 = int_to_ptr.vmem [resolvable:$true] %s344
          %350 = dma.hbm_to_vmem [thread:$0]  %s6, 1024, %s345, [#allocation9], 64, 64, 4
        $region32: #{tpu_custom_call.1} parent=11 // pred_fallthru
          _
        // Predicated region
        $region33: #{tpu_custom_call.1} parent=11 // pred_check
          %p351 = pneg %p221
        $region34: #{tpu_custom_call.1} parent=11 // pred_check_branch
          %353 = sbr.rel (%p351) target = $region36
        $region35: #{tpu_custom_call.1} parent=11 // pred_region
          _
        $region36: #{tpu_custom_call.1} parent=11 // pred_fallthru
          _
        // Predicated region
        $region37: #{tpu_custom_call.1} parent=11 // pred_check
          %p354 = pneg %p242
        $region38: #{tpu_custom_call.1} parent=11 // pred_check_branch
          %356 = sbr.rel (%p354) target = $region40
        $region39: #{tpu_custom_call.1} parent=11 // pred_region
          %s358 = ssub.s32 1024, 1024
          %359 = vsyncadd [#allocation12], %s358
          %s360 = sshll.u32 [#allocation11], 4
          %s361 = int_to_ptr.vmem [resolvable:$true] %s360
          %366 = dma.hbm_to_vmem [thread:$0]  %s8, 1024, %s361, [#allocation12], 64, 64, 4
        $region40: #{tpu_custom_call.1} parent=11 // pred_fallthru
          _
        // Predicated region
        $region41: #{tpu_custom_call.1} parent=11 // pred_check
          %p367 = pneg %p263
        $region42: #{tpu_custom_call.1} parent=11 // pred_check_branch
          %369 = sbr.rel (%p367) target = $region44
        $region43: #{tpu_custom_call.1} parent=11 // pred_region
          _
        $region44: #{tpu_custom_call.1} parent=11 // pred_fallthru
          _
      $region12: #{tpu_custom_call.1} parent=5 // pred_fallthru
        _
      %p370 = scmp.lt.s32.totalorder %s27, 4
      // Predicated region
      $region45: #{tpu_custom_call.1} parent=5 // pred_check
        %p371 = pneg %p370
      $region46: #{tpu_custom_call.1} parent=5 // pred_check_branch
        %373 = sbr.rel (%p371) target = $region48
      $region47: #{tpu_custom_call.1} parent=5 // pred_region
        // Predicated region
        $region49: #{tpu_custom_call.1} parent=47 // pred_check
          %p374 = pneg %p61
        $region50: #{tpu_custom_call.1} parent=47 // pred_check_branch
          %376 = sbr.rel (%p374) target = $region52
        $region51: #{tpu_custom_call.1} parent=47 // pred_region
          %s377 = sand.u32 %s51, 1
          %s378 = scalar_lea.sflag [#allocation3], %s377
          %s379 = sand.u32 %s51, 1
          %s380 = smul.addr %s379, 4
          %s381 = scalar_lea.vmem [#allocation2], %s380
          %s383 = ssub.s32 64, 64
          %384 = vsyncadd %s378, %s383
          %s385 = smul.addr %s34, 2
          %s386 = sadd.s32 %s35, %s385
          %s387 = smul.addr %s386, 64
          %s388 = scalar_lea.hbm %s0, %s387
          %s390 = sshll.u32 %s381, 4
          %s391 = int_to_ptr.vmem [resolvable:$true] %s390
          %393 = dma.hbm_to_vmem [thread:$0]  %s388, 64, %s391, %s378
        $region52: #{tpu_custom_call.1} parent=47 // pred_fallthru
          _
        // Predicated region
        $region53: #{tpu_custom_call.1} parent=47 // pred_check
          %p394 = pneg %p89
        $region54: #{tpu_custom_call.1} parent=47 // pred_check_branch
          %396 = sbr.rel (%p394) target = $region56
        $region55: #{tpu_custom_call.1} parent=47 // pred_region
          %s397 = sand.u32 %s27, 1
          %s398 = scalar_lea.sflag [#allocation6], %s397
          %s399 = sand.u32 %s79, 1
          %s400 = smul.addr %s399, 4
          %s401 = scalar_lea.vmem [#allocation5], %s400
          %s403 = ssub.s32 64, 64
          %404 = vsyncadd %s398, %s403
          %s405 = smul.addr %s34, 2
          %s406 = sadd.s32 %s35, %s405
          %s407 = smul.addr %s406, 64
          %s408 = scalar_lea.hbm %s1, %s407
          %s410 = sshll.u32 %s401, 4
          %s411 = int_to_ptr.vmem [resolvable:$true] %s410
          %413 = dma.hbm_to_vmem [thread:$0]  %s408, 64, %s411, %s398
        $region56: #{tpu_custom_call.1} parent=47 // pred_fallthru
          _
      $region48: #{tpu_custom_call.1} parent=5 // pred_fallthru
        _
      %p414 = scmp.le.s32.totalorder 1, %s27
      %p415 = scmp.lt.s32.totalorder %s27, 5
      %p416 = pnand %p414, %p415
      %p417 = pneg %p416
      // Predicated region
      $region57: #{tpu_custom_call.1} parent=5 // pred_check
        _
      $region58: #{tpu_custom_call.1} parent=5 // pred_check_branch
        %419 = sbr.rel (%p416) target = $region60
      $region59: #{tpu_custom_call.1} parent=5 // pred_region
        %s420 = ssub.s32 %s27, 1
        %s421 = sand.u32 %s54, 1
        %s422 = scalar_lea.sflag [#allocation3], %s421
        %s423 = sand.u32 %s54, 1
        %s424 = smul.addr %s423, 4
        %s425 = scalar_lea.vmem [#allocation2], %s424
        // Predicated region
        $region61: #{tpu_custom_call.1} parent=59 // pred_check
          %p426 = pneg %p67
        $region62: #{tpu_custom_call.1} parent=59 // pred_check_branch
          %428 = sbr.rel (%p426) target = $region64
        $region63: #{tpu_custom_call.1} parent=59 // pred_region
          %429 = dma.done %s422, 64
        $region64: #{tpu_custom_call.1} parent=59 // pred_fallthru
          _
        %s430 = sand.u32 %s32, 1
        %s431 = scalar_lea.sflag [#allocation6], %s430
        %s432 = sand.u32 %s82, 1
        %s433 = smul.addr %s432, 4
        %s434 = scalar_lea.vmem [#allocation5], %s433
        // Predicated region
        $region65: #{tpu_custom_call.1} parent=59 // pred_check
          %p435 = pneg %p95
        $region66: #{tpu_custom_call.1} parent=59 // pred_check_branch
          %437 = sbr.rel (%p435) target = $region68
        $region67: #{tpu_custom_call.1} parent=59 // pred_region
          %438 = dma.done %s431, 64
        $region68: #{tpu_custom_call.1} parent=59 // pred_fallthru
          _
        // Predicated region
        $region69: #{tpu_custom_call.1} parent=59 // pred_check
          %p439 = pneg %p116
        $region70: #{tpu_custom_call.1} parent=59 // pred_check_branch
          %441 = sbr.rel (%p439) target = $region72
        $region71: #{tpu_custom_call.1} parent=59 // pred_region
          %442 = dma.done [#allocation6], 1024
        $region72: #{tpu_custom_call.1} parent=59 // pred_fallthru
          _
        // Predicated region
        $region73: #{tpu_custom_call.1} parent=59 // pred_check
          %p443 = pneg %p158
        $region74: #{tpu_custom_call.1} parent=59 // pred_check_branch
          %445 = sbr.rel (%p443) target = $region76
        $region75: #{tpu_custom_call.1} parent=59 // pred_region
          %446 = dma.done [#allocation9], 3072
        $region76: #{tpu_custom_call.1} parent=59 // pred_fallthru
          _
        // Predicated region
        $region77: #{tpu_custom_call.1} parent=59 // pred_check
          %p447 = pneg %p200
        $region78: #{tpu_custom_call.1} parent=59 // pred_check_branch
          %449 = sbr.rel (%p447) target = $region80
        $region79: #{tpu_custom_call.1} parent=59 // pred_region
          %450 = dma.done [#allocation9], 1024
        $region80: #{tpu_custom_call.1} parent=59 // pred_fallthru
          _
        // Predicated region
        $region81: #{tpu_custom_call.1} parent=59 // pred_check
          %p451 = pneg %p242
        $region82: #{tpu_custom_call.1} parent=59 // pred_check_branch
          %453 = sbr.rel (%p451) target = $region84
        $region83: #{tpu_custom_call.1} parent=59 // pred_region
          %454 = dma.done [#allocation12], 1024
        $region84: #{tpu_custom_call.1} parent=59 // pred_fallthru
          _
        %s455 = sand.u32 %s54, 1
        %s456 = scalar_lea.sflag [#allocation3], %s455
        %s457 = sand.u32 %s54, 1
        %s458 = smul.addr %s457, 4
        %s459 = scalar_lea.vmem [#allocation2], %s458
        %p460 = pneg %p67
        %p461 = pneg %p64
        %s462 = sand.u32 %s32, 1
        %s463 = scalar_lea.sflag [#allocation6], %s462
        %s464 = sand.u32 %s82, 1
        %s465 = smul.addr %s464, 4
        %s466 = scalar_lea.vmem [#allocation5], %s465
        %p467 = pneg %p95
        %p468 = pneg %p92
        %p469 = pneg %p116
        %p470 = pneg %p113
        %p471 = pneg %p137
        %p472 = pneg %p134
        %p473 = pneg %p158
        %p474 = pneg %p155
        %p475 = pneg %p179
        %p476 = pneg %p176
        %p477 = pneg %p200
        %p478 = pneg %p197
        %p479 = pneg %p221
        %p480 = pneg %p218
        %p481 = pneg %p242
        %p482 = pneg %p239
        %p483 = pneg %p263
        %p484 = pneg %p260
        %p485 = pneg %p291
        %p486 = pneg %p288
        %s487 = sand.u32 %s278, 1
        %s488 = scalar_lea.sflag [#allocation4], %s487
        %s489 = sand.u32 %s278, 1
        %s490 = smul.addr %s489, 4
        %s491 = scalar_lea.vmem [#allocation13], %s490
        %v493 = vld [vmem:[#allocation7] sm:$0xf]
        %v494 = vld [vmem:[#allocation7 + $0x4] sm:$0xf]
        %v495 = vld [vmem:[#allocation7 + $0x8] sm:$0xf]
        %v496 = vld [vmem:[#allocation7 + $0xc] sm:$0xf]
        %v497 = vld [vmem:[#allocation7 + $0x10] sm:$0xf]
        %v498 = vld [vmem:[#allocation7 + $0x14] sm:$0xf]
        %v499 = vld [vmem:[#allocation7 + $0x18] sm:$0xf]
        %v500 = vld [vmem:[#allocation7 + $0x1c] sm:$0xf]
        %v501 = vld [vmem:[#allocation7 + $0x20] sm:$0xf]
        %v502 = vld [vmem:[#allocation7 + $0x24] sm:$0xf]
        %v503 = vld [vmem:[#allocation7 + $0x28] sm:$0xf]
        %v504 = vld [vmem:[#allocation7 + $0x2c] sm:$0xf]
        %v505 = vld [vmem:[#allocation7 + $0x30] sm:$0xf]
        %v506 = vld [vmem:[#allocation7 + $0x34] sm:$0xf]
        %v507 = vld [vmem:[#allocation7 + $0x38] sm:$0xf]
        %v508 = vld [vmem:[#allocation7 + $0x3c] sm:$0xf]
        %v509 = vld [vmem:[%s434] sm:$0xf]
        %v510 = vld [vmem:[%s3] sm:$0x1]
        %v512 = vlaneseq
        %v513 = vshrl.u32 %v512, 7
        %v514 = vsub.s32 0, %v513
        %v515 = vrot.slane %v510, %v514
        %v533 = vunpack.c.l.b16 %v493
        %v534 = vunpack.c.l.b16 %v494
        %v535 = vunpack.c.l.b16 %v495
        %v536 = vunpack.c.l.b16 %v496
        %v537 = vunpack.c.l.b16 %v497
        %v538 = vunpack.c.l.b16 %v498
        %v539 = vunpack.c.l.b16 %v499
        %v540 = vunpack.c.l.b16 %v500
        %v541 = vunpack.c.l.b16 %v501
        %v542 = vunpack.c.l.b16 %v502
        %v543 = vunpack.c.l.b16 %v503
        %v544 = vunpack.c.l.b16 %v504
        %v545 = vunpack.c.l.b16 %v505
        %v546 = vunpack.c.l.b16 %v506
        %v547 = vunpack.c.l.b16 %v507
        %v548 = vunpack.c.l.b16 %v508
        %v549 = vpack.c.b16 %v534, %v533
        %v550 = vpack.c.b16 %v536, %v535
        %v551 = vpack.c.b16 %v538, %v537
        %v552 = vpack.c.b16 %v540, %v539
        %v553 = vpack.c.b16 %v542, %v541
        %v554 = vpack.c.b16 %v544, %v543
        %v555 = vpack.c.b16 %v546, %v545
        %v556 = vpack.c.b16 %v548, %v547
        %565 = vmatprep.subr.bf16.mxu0 0
        %566 = vmatpush1.bf16.msra.mxu0 %v549
        %567 = vmatprep.subr.bf16.mxu0 0
        %568 = vmatpush1.bf16.msra.mxu0 %v550
        %569 = vmatprep.subr.bf16.mxu0 0
        %570 = vmatpush1.bf16.msra.mxu0 %v551
        %571 = vmatprep.subr.bf16.mxu0 0
        %572 = vmatpush1.bf16.msra.mxu0 %v552
        %573 = vmatprep.subr.bf16.mxu0 0
        %574 = vmatpush1.bf16.msra.mxu0 %v553
        %575 = vmatprep.subr.bf16.mxu0 0
        %576 = vmatpush1.bf16.msra.mxu0 %v554
        %577 = vmatprep.subr.bf16.mxu0 0
        %578 = vmatpush1.bf16.msra.mxu0 %v555
        %579 = vmatprep.subr.bf16.mxu0 0
        %580 = vmatpush1.bf16.msra.mxu0 %v556
        %581 = vmatprep.subr.bf16.mxu0 0
        %582 = vmatpush1.bf16.msra.mxu0 0
        %583 = vmatprep.subr.bf16.mxu0 0
        %584 = vmatpush1.bf16.msra.mxu0 0
        %585 = vmatprep.subr.bf16.mxu0 0
        %586 = vmatpush1.bf16.msra.mxu0 0
        %587 = vmatprep.subr.bf16.mxu0 0
        %588 = vmatpush1.bf16.msra.mxu0 0
        %589 = vmatprep.subr.bf16.mxu0 0
        %590 = vmatpush1.bf16.msra.mxu0 0
        %591 = vmatprep.subr.bf16.mxu0 0
        %592 = vmatpush1.bf16.msra.mxu0 0
        %593 = vmatprep.subr.bf16.mxu0 0
        %594 = vmatpush1.bf16.msra.mxu0 0
        %595 = vmatprep.subr.bf16.mxu0 0
        %596 = vmatpush1.bf16.msra.mxu0 0
        %597 = vmatprep.mubr.bf16.mxu0 0
        %598 = vmatmul.mubr.bf16.gmra.mrb[0].mxu0 %v509
        %v599 = vpop.f32.mrb[0].mxu0
        %v600 = vadd.f32 %v515, %v599
        %v601 = vpop.f32.mrb[0].mxu0
        %v602 = vpop.f32.mrb[0].mxu0
        %v603 = vpop.f32.mrb[0].mxu0
        %604 = vdwg.mxu0
        %v605 = vmax.f32 %v600, 0.0
        %p606 = scmp.gt.s32.totalorder %s37, 0
        %s607 = scalar_select %p606, 1.0, 0.0
        %v608 = vstv %s607
        %v609 = vmul.f32 %v605, %v608
        %v610 = vld [vmem:[%s425] sm:$0xf]
        %611 = vmatprep.subr.bf16.mxu0 0
        %612 = vmatpush1.bf16.msra.mxu0 %v549
        %613 = vmatprep.subr.bf16.mxu0 0
        %614 = vmatpush1.bf16.msra.mxu0 %v550
        %615 = vmatprep.subr.bf16.mxu0 0
        %616 = vmatpush1.bf16.msra.mxu0 %v551
        %617 = vmatprep.subr.bf16.mxu0 0
        %618 = vmatpush1.bf16.msra.mxu0 %v552
        %619 = vmatprep.subr.bf16.mxu0 0
        %620 = vmatpush1.bf16.msra.mxu0 %v553
        %621 = vmatprep.subr.bf16.mxu0 0
        %622 = vmatpush1.bf16.msra.mxu0 %v554
        %623 = vmatprep.subr.bf16.mxu0 0
        %624 = vmatpush1.bf16.msra.mxu0 %v555
        %625 = vmatprep.subr.bf16.mxu0 0
        %626 = vmatpush1.bf16.msra.mxu0 %v556
        %627 = vmatprep.subr.bf16.mxu0 0
        %628 = vmatpush1.bf16.msra.mxu0 0
        %629 = vmatprep.subr.bf16.mxu0 0
        %630 = vmatpush1.bf16.msra.mxu0 0
        %631 = vmatprep.subr.bf16.mxu0 0
        %632 = vmatpush1.bf16.msra.mxu0 0
        %633 = vmatprep.subr.bf16.mxu0 0
        %634 = vmatpush1.bf16.msra.mxu0 0
        %635 = vmatprep.subr.bf16.mxu0 0
        %636 = vmatpush1.bf16.msra.mxu0 0
        %637 = vmatprep.subr.bf16.mxu0 0
        %638 = vmatpush1.bf16.msra.mxu0 0
        %639 = vmatprep.subr.bf16.mxu0 0
        %640 = vmatpush1.bf16.msra.mxu0 0
        %641 = vmatprep.subr.bf16.mxu0 0
        %642 = vmatpush1.bf16.msra.mxu0 0
        %643 = vmatprep.mubr.bf16.mxu0 0
        %644 = vmatmul.mubr.bf16.gmra.mrb[0].mxu0 %v610
        %v645 = vpop.f32.mrb[0].mxu0
        %v646 = vadd.f32 %v515, %v645
        %v647 = vpop.f32.mrb[0].mxu0
        %v648 = vpop.f32.mrb[0].mxu0
        %v649 = vpop.f32.mrb[0].mxu0
        %650 = vdwg.mxu0
        %v651 = vmax.f32 %v646, 0.0
        %s652 = sadd.s32 %s37, 1
        %s653 = smul.u32 %s652, 8
        %p654 = scmp.lt.s32.totalorder %s653, 16
        %s655 = scalar_select %p654, 1.0, 0.0
        %v656 = vstv %s655
        %v657 = vmul.f32 %v605, %v656
        %v659 = vrot.slane %v651, 7
        %vm661 = vcmask 1040384
        %v662 = vsel %vm661, %v609, %v659
        %v663 = vrot.slane %v651, 1
        %v666 = vrot.slane %v657, 2
        %vm668 = vcmask 1046528
        %v669 = vsel %vm668, %v663, %v666
        %v670 = vpack.c.bf16 %v662, %v662
        %v671 = vld [vmem:[#allocation8] sm:$0xf]
        %v672 = vld [vmem:[#allocation8 + $0x4] sm:$0xf]
        %v673 = vld [vmem:[#allocation8 + $0x8] sm:$0xf]
        %v674 = vld [vmem:[#allocation8 + $0xc] sm:$0xf]
        %v675 = vld [vmem:[#allocation8 + $0x10] sm:$0xf]
        %v676 = vld [vmem:[#allocation8 + $0x14] sm:$0xf]
        %v677 = vld [vmem:[#allocation8 + $0x18] sm:$0xf]
        %v678 = vld [vmem:[#allocation8 + $0x1c] sm:$0xf]
        %v679 = vld [vmem:[#allocation8 + $0x20] sm:$0xf]
        %v680 = vld [vmem:[#allocation8 + $0x24] sm:$0xf]
        %v681 = vld [vmem:[#allocation8 + $0x28] sm:$0xf]
        %v682 = vld [vmem:[#allocation8 + $0x2c] sm:$0xf]
        %v683 = vld [vmem:[#allocation8 + $0x30] sm:$0xf]
        %v684 = vld [vmem:[#allocation8 + $0x34] sm:$0xf]
        %v685 = vld [vmem:[#allocation8 + $0x38] sm:$0xf]
        %v686 = vld [vmem:[#allocation8 + $0x3c] sm:$0xf]
        %v687 = vpack.c.bf16 %v651, %v651
        %s688 = scalar_lea.vmem [#allocation8], 64
        %v689 = vld [vmem:[%s688] sm:$0xf]
        %v690 = vld [vmem:[%s688 + $0x4] sm:$0xf]
        %v691 = vld [vmem:[%s688 + $0x8] sm:$0xf]
        %v692 = vld [vmem:[%s688 + $0xc] sm:$0xf]
        %v693 = vld [vmem:[%s688 + $0x10] sm:$0xf]
        %v694 = vld [vmem:[%s688 + $0x14] sm:$0xf]
        %v695 = vld [vmem:[%s688 + $0x18] sm:$0xf]
        %v696 = vld [vmem:[%s688 + $0x1c] sm:$0xf]
        %v697 = vld [vmem:[%s688 + $0x20] sm:$0xf]
        %v698 = vld [vmem:[%s688 + $0x24] sm:$0xf]
        %v699 = vld [vmem:[%s688 + $0x28] sm:$0xf]
        %v700 = vld [vmem:[%s688 + $0x2c] sm:$0xf]
        %v701 = vld [vmem:[%s688 + $0x30] sm:$0xf]
        %v702 = vld [vmem:[%s688 + $0x34] sm:$0xf]
        %v703 = vld [vmem:[%s688 + $0x38] sm:$0xf]
        %v704 = vld [vmem:[%s688 + $0x3c] sm:$0xf]
        %v721 = vunpack.c.l.b16 %v689
        %v722 = vunpack.c.l.b16 %v690
        %v723 = vunpack.c.l.b16 %v691
        %v724 = vunpack.c.l.b16 %v692
        %v725 = vunpack.c.l.b16 %v693
        %v726 = vunpack.c.l.b16 %v694
        %v727 = vunpack.c.l.b16 %v695
        %v728 = vunpack.c.l.b16 %v696
        %v729 = vunpack.c.l.b16 %v697
        %v730 = vunpack.c.l.b16 %v698
        %v731 = vunpack.c.l.b16 %v699
        %v732 = vunpack.c.l.b16 %v700
        %v733 = vunpack.c.l.b16 %v701
        %v734 = vunpack.c.l.b16 %v702
        %v735 = vunpack.c.l.b16 %v703
        %v736 = vunpack.c.l.b16 %v704
        %v737 = vpack.c.b16 %v722, %v721
        %v738 = vpack.c.b16 %v724, %v723
        %v739 = vpack.c.b16 %v726, %v725
        %v740 = vpack.c.b16 %v728, %v727
        %v741 = vpack.c.b16 %v730, %v729
        %v742 = vpack.c.b16 %v732, %v731
        %v743 = vpack.c.b16 %v734, %v733
        %v744 = vpack.c.b16 %v736, %v735
        %753 = vmatprep.subr.bf16.mxu0 0
        %754 = vmatpush1.bf16.msra.mxu0 %v737
        %755 = vmatprep.subr.bf16.mxu0 0
        %756 = vmatpush1.bf16.msra.mxu0 %v738
        %757 = vmatprep.subr.bf16.mxu0 0
        %758 = vmatpush1.bf16.msra.mxu0 %v739
        %759 = vmatprep.subr.bf16.mxu0 0
        %760 = vmatpush1.bf16.msra.mxu0 %v740
        %761 = vmatprep.subr.bf16.mxu0 0
        %762 = vmatpush1.bf16.msra.mxu0 %v741
        %763 = vmatprep.subr.bf16.mxu0 0
        %764 = vmatpush1.bf16.msra.mxu0 %v742
        %765 = vmatprep.subr.bf16.mxu0 0
        %766 = vmatpush1.bf16.msra.mxu0 %v743
        %767 = vmatprep.subr.bf16.mxu0 0
        %768 = vmatpush1.bf16.msra.mxu0 %v744
        %769 = vmatprep.subr.bf16.mxu0 0
        %770 = vmatpush1.bf16.msra.mxu0 0
        %771 = vmatprep.subr.bf16.mxu0 0
        %772 = vmatpush1.bf16.msra.mxu0 0
        %773 = vmatprep.subr.bf16.mxu0 0
        %774 = vmatpush1.bf16.msra.mxu0 0
        %775 = vmatprep.subr.bf16.mxu0 0
        %776 = vmatpush1.bf16.msra.mxu0 0
        %777 = vmatprep.subr.bf16.mxu0 0
        %778 = vmatpush1.bf16.msra.mxu0 0
        %779 = vmatprep.subr.bf16.mxu0 0
        %780 = vmatpush1.bf16.msra.mxu0 0
        %781 = vmatprep.subr.bf16.mxu0 0
        %782 = vmatpush1.bf16.msra.mxu0 0
        %783 = vmatprep.subr.bf16.mxu0 0
        %784 = vmatpush1.bf16.msra.mxu0 0
        %785 = vmatprep.mubr.bf16.mxu0 0
        %786 = vmatmul.mubr.bf16.gmra.mrb[0].mxu0 %v687
        %v787 = vpop.f32.mrb[0].mxu0
        %v788 = vadd.f32 0.0, %v787
        %v789 = vpop.f32.mrb[0].mxu0
        %v790 = vpop.f32.mrb[0].mxu0
        %v791 = vpop.f32.mrb[0].mxu0
        %792 = vdwg.mxu0
        %v809 = vunpack.c.l.b16 %v671
        %v810 = vunpack.c.l.b16 %v672
        %v811 = vunpack.c.l.b16 %v673
        %v812 = vunpack.c.l.b16 %v674
        %v813 = vunpack.c.l.b16 %v675
        %v814 = vunpack.c.l.b16 %v676
        %v815 = vunpack.c.l.b16 %v677
        %v816 = vunpack.c.l.b16 %v678
        %v817 = vunpack.c.l.b16 %v679
        %v818 = vunpack.c.l.b16 %v680
        %v819 = vunpack.c.l.b16 %v681
        %v820 = vunpack.c.l.b16 %v682
        %v821 = vunpack.c.l.b16 %v683
        %v822 = vunpack.c.l.b16 %v684
        %v823 = vunpack.c.l.b16 %v685
        %v824 = vunpack.c.l.b16 %v686
        %v825 = vpack.c.b16 %v810, %v809
        %v826 = vpack.c.b16 %v812, %v811
        %v827 = vpack.c.b16 %v814, %v813
        %v828 = vpack.c.b16 %v816, %v815
        %v829 = vpack.c.b16 %v818, %v817
        %v830 = vpack.c.b16 %v820, %v819
        %v831 = vpack.c.b16 %v822, %v821
        %v832 = vpack.c.b16 %v824, %v823
        %841 = vmatprep.subr.bf16.mxu0 0
        %842 = vmatpush1.bf16.msra.mxu0 %v825
        %843 = vmatprep.subr.bf16.mxu0 0
        %844 = vmatpush1.bf16.msra.mxu0 %v826
        %845 = vmatprep.subr.bf16.mxu0 0
        %846 = vmatpush1.bf16.msra.mxu0 %v827
        %847 = vmatprep.subr.bf16.mxu0 0
        %848 = vmatpush1.bf16.msra.mxu0 %v828
        %849 = vmatprep.subr.bf16.mxu0 0
        %850 = vmatpush1.bf16.msra.mxu0 %v829
        %851 = vmatprep.subr.bf16.mxu0 0
        %852 = vmatpush1.bf16.msra.mxu0 %v830
        %853 = vmatprep.subr.bf16.mxu0 0
        %854 = vmatpush1.bf16.msra.mxu0 %v831
        %855 = vmatprep.subr.bf16.mxu0 0
        %856 = vmatpush1.bf16.msra.mxu0 %v832
        %857 = vmatprep.subr.bf16.mxu0 0
        %858 = vmatpush1.bf16.msra.mxu0 0
        %859 = vmatprep.subr.bf16.mxu0 0
        %860 = vmatpush1.bf16.msra.mxu0 0
        %861 = vmatprep.subr.bf16.mxu0 0
        %862 = vmatpush1.bf16.msra.mxu0 0
        %863 = vmatprep.subr.bf16.mxu0 0
        %864 = vmatpush1.bf16.msra.mxu0 0
        %865 = vmatprep.subr.bf16.mxu0 0
        %866 = vmatpush1.bf16.msra.mxu0 0
        %867 = vmatprep.subr.bf16.mxu0 0
        %868 = vmatpush1.bf16.msra.mxu0 0
        %869 = vmatprep.subr.bf16.mxu0 0
        %870 = vmatpush1.bf16.msra.mxu0 0
        %871 = vmatprep.subr.bf16.mxu0 0
        %872 = vmatpush1.bf16.msra.mxu0 0
        %873 = vmatprep.mubr.bf16.mxu0 0
        %874 = vmatmul.mubr.bf16.gmra.mrb[0].mxu0 %v670
        %v875 = vpop.f32.mrb[0].mxu0
        %v876 = vadd.f32 %v788, %v875
        %v877 = vpop.f32.mrb[0].mxu0
        %v878 = vpop.f32.mrb[0].mxu0
        %v879 = vpop.f32.mrb[0].mxu0
        %880 = vdwg.mxu0
        %v881 = vpack.c.bf16 %v669, %v669
        %s882 = scalar_lea.vmem [#allocation8], 128
        %v883 = vld [vmem:[%s882] sm:$0xf]
        %v884 = vld [vmem:[%s882 + $0x4] sm:$0xf]
        %v885 = vld [vmem:[%s882 + $0x8] sm:$0xf]
        %v886 = vld [vmem:[%s882 + $0xc] sm:$0xf]
        %v887 = vld [vmem:[%s882 + $0x10] sm:$0xf]
        %v888 = vld [vmem:[%s882 + $0x14] sm:$0xf]
        %v889 = vld [vmem:[%s882 + $0x18] sm:$0xf]
        %v890 = vld [vmem:[%s882 + $0x1c] sm:$0xf]
        %v891 = vld [vmem:[%s882 + $0x20] sm:$0xf]
        %v892 = vld [vmem:[%s882 + $0x24] sm:$0xf]
        %v893 = vld [vmem:[%s882 + $0x28] sm:$0xf]
        %v894 = vld [vmem:[%s882 + $0x2c] sm:$0xf]
        %v895 = vld [vmem:[%s882 + $0x30] sm:$0xf]
        %v896 = vld [vmem:[%s882 + $0x34] sm:$0xf]
        %v897 = vld [vmem:[%s882 + $0x38] sm:$0xf]
        %v898 = vld [vmem:[%s882 + $0x3c] sm:$0xf]
        %v915 = vunpack.c.l.b16 %v883
        %v916 = vunpack.c.l.b16 %v884
        %v917 = vunpack.c.l.b16 %v885
        %v918 = vunpack.c.l.b16 %v886
        %v919 = vunpack.c.l.b16 %v887
        %v920 = vunpack.c.l.b16 %v888
        %v921 = vunpack.c.l.b16 %v889
        %v922 = vunpack.c.l.b16 %v890
        %v923 = vunpack.c.l.b16 %v891
        %v924 = vunpack.c.l.b16 %v892
        %v925 = vunpack.c.l.b16 %v893
        %v926 = vunpack.c.l.b16 %v894
        %v927 = vunpack.c.l.b16 %v895
        %v928 = vunpack.c.l.b16 %v896
        %v929 = vunpack.c.l.b16 %v897
        %v930 = vunpack.c.l.b16 %v898
        %v931 = vpack.c.b16 %v916, %v915
        %v932 = vpack.c.b16 %v918, %v917
        %v933 = vpack.c.b16 %v920, %v919
        %v934 = vpack.c.b16 %v922, %v921
        %v935 = vpack.c.b16 %v924, %v923
        %v936 = vpack.c.b16 %v926, %v925
        %v937 = vpack.c.b16 %v928, %v927
        %v938 = vpack.c.b16 %v930, %v929
        %947 = vmatprep.subr.bf16.mxu0 0
        %948 = vmatpush1.bf16.msra.mxu0 %v931
        %949 = vmatprep.subr.bf16.mxu0 0
        %950 = vmatpush1.bf16.msra.mxu0 %v932
        %951 = vmatprep.subr.bf16.mxu0 0
        %952 = vmatpush1.bf16.msra.mxu0 %v933
        %953 = vmatprep.subr.bf16.mxu0 0
        %954 = vmatpush1.bf16.msra.mxu0 %v934
        %955 = vmatprep.subr.bf16.mxu0 0
        %956 = vmatpush1.bf16.msra.mxu0 %v935
        %957 = vmatprep.subr.bf16.mxu0 0
        %958 = vmatpush1.bf16.msra.mxu0 %v936
        %959 = vmatprep.subr.bf16.mxu0 0
        %960 = vmatpush1.bf16.msra.mxu0 %v937
        %961 = vmatprep.subr.bf16.mxu0 0
        %962 = vmatpush1.bf16.msra.mxu0 %v938
        %963 = vmatprep.subr.bf16.mxu0 0
        %964 = vmatpush1.bf16.msra.mxu0 0
        %965 = vmatprep.subr.bf16.mxu0 0
        %966 = vmatpush1.bf16.msra.mxu0 0
        %967 = vmatprep.subr.bf16.mxu0 0
        %968 = vmatpush1.bf16.msra.mxu0 0
        %969 = vmatprep.subr.bf16.mxu0 0
        %970 = vmatpush1.bf16.msra.mxu0 0
        %971 = vmatprep.subr.bf16.mxu0 0
        %972 = vmatpush1.bf16.msra.mxu0 0
        %973 = vmatprep.subr.bf16.mxu0 0
        %974 = vmatpush1.bf16.msra.mxu0 0
        %975 = vmatprep.subr.bf16.mxu0 0
        %976 = vmatpush1.bf16.msra.mxu0 0
        %977 = vmatprep.subr.bf16.mxu0 0
        %978 = vmatpush1.bf16.msra.mxu0 0
        %979 = vmatprep.mubr.bf16.mxu0 0
        %980 = vmatmul.mubr.bf16.gmra.mrb[0].mxu0 %v881
        %v981 = vpop.f32.mrb[0].mxu0
        %v982 = vadd.f32 0.0, %v981
        %v983 = vpop.f32.mrb[0].mxu0
        %v984 = vpop.f32.mrb[0].mxu0
        %v985 = vpop.f32.mrb[0].mxu0
        %986 = vdwg.mxu0
        %v987 = vadd.f32 %v876, %v982
        %v988 = vld [vmem:[%s5] sm:$0x1]
        %v990 = vlaneseq
        %v991 = vshrl.u32 %v990, 7
        %v992 = vsub.s32 0, %v991
        %v993 = vrot.slane %v988, %v992
        %v995 = vadd.f32 %v987, %v993
        %v996 = vmax.f32 %v995, 0.0
        %v997 = vpack.c.bf16 %v996, %v996
        %v998 = vld [vmem:[#allocation10] sm:$0xf]
        %v999 = vld [vmem:[#allocation10 + $0x4] sm:$0xf]
        %v1000 = vld [vmem:[#allocation10 + $0x8] sm:$0xf]
        %v1001 = vld [vmem:[#allocation10 + $0xc] sm:$0xf]
        %v1002 = vld [vmem:[#allocation10 + $0x10] sm:$0xf]
        %v1003 = vld [vmem:[#allocation10 + $0x14] sm:$0xf]
        %v1004 = vld [vmem:[#allocation10 + $0x18] sm:$0xf]
        %v1005 = vld [vmem:[#allocation10 + $0x1c] sm:$0xf]
        %v1006 = vld [vmem:[#allocation10 + $0x20] sm:$0xf]
        %v1007 = vld [vmem:[#allocation10 + $0x24] sm:$0xf]
        %v1008 = vld [vmem:[#allocation10 + $0x28] sm:$0xf]
        %v1009 = vld [vmem:[#allocation10 + $0x2c] sm:$0xf]
        %v1010 = vld [vmem:[#allocation10 + $0x30] sm:$0xf]
        %v1011 = vld [vmem:[#allocation10 + $0x34] sm:$0xf]
        %v1012 = vld [vmem:[#allocation10 + $0x38] sm:$0xf]
        %v1013 = vld [vmem:[#allocation10 + $0x3c] sm:$0xf]
        %v1014 = vld [vmem:[%s7] sm:$0x1]
        %v1016 = vlaneseq
        %v1017 = vshrl.u32 %v1016, 7
        %v1018 = vsub.s32 0, %v1017
        %v1019 = vrot.slane %v1014, %v1018
        %v1037 = vunpack.c.l.b16 %v998
        %v1038 = vunpack.c.l.b16 %v999
        %v1039 = vunpack.c.l.b16 %v1000
        %v1040 = vunpack.c.l.b16 %v1001
        %v1041 = vunpack.c.l.b16 %v1002
        %v1042 = vunpack.c.l.b16 %v1003
        %v1043 = vunpack.c.l.b16 %v1004
        %v1044 = vunpack.c.l.b16 %v1005
        %v1045 = vunpack.c.l.b16 %v1006
        %v1046 = vunpack.c.l.b16 %v1007
        %v1047 = vunpack.c.l.b16 %v1008
        %v1048 = vunpack.c.l.b16 %v1009
        %v1049 = vunpack.c.l.b16 %v1010
        %v1050 = vunpack.c.l.b16 %v1011
        %v1051 = vunpack.c.l.b16 %v1012
        %v1052 = vunpack.c.l.b16 %v1013
        %v1053 = vpack.c.b16 %v1038, %v1037
        %v1054 = vpack.c.b16 %v1040, %v1039
        %v1055 = vpack.c.b16 %v1042, %v1041
        %v1056 = vpack.c.b16 %v1044, %v1043
        %v1057 = vpack.c.b16 %v1046, %v1045
        %v1058 = vpack.c.b16 %v1048, %v1047
        %v1059 = vpack.c.b16 %v1050, %v1049
        %v1060 = vpack.c.b16 %v1052, %v1051
        %1069 = vmatprep.subr.bf16.mxu0 0
        %1070 = vmatpush1.bf16.msra.mxu0 %v1053
        %1071 = vmatprep.subr.bf16.mxu0 0
        %1072 = vmatpush1.bf16.msra.mxu0 %v1054
        %1073 = vmatprep.subr.bf16.mxu0 0
        %1074 = vmatpush1.bf16.msra.mxu0 %v1055
        %1075 = vmatprep.subr.bf16.mxu0 0
        %1076 = vmatpush1.bf16.msra.mxu0 %v1056
        %1077 = vmatprep.subr.bf16.mxu0 0
        %1078 = vmatpush1.bf16.msra.mxu0 %v1057
        %1079 = vmatprep.subr.bf16.mxu0 0
        %1080 = vmatpush1.bf16.msra.mxu0 %v1058
        %1081 = vmatprep.subr.bf16.mxu0 0
        %1082 = vmatpush1.bf16.msra.mxu0 %v1059
        %1083 = vmatprep.subr.bf16.mxu0 0
        %1084 = vmatpush1.bf16.msra.mxu0 %v1060
        %1085 = vmatprep.subr.bf16.mxu0 0
        %1086 = vmatpush1.bf16.msra.mxu0 0
        %1087 = vmatprep.subr.bf16.mxu0 0
        %1088 = vmatpush1.bf16.msra.mxu0 0
        %1089 = vmatprep.subr.bf16.mxu0 0
        %1090 = vmatpush1.bf16.msra.mxu0 0
        %1091 = vmatprep.subr.bf16.mxu0 0
        %1092 = vmatpush1.bf16.msra.mxu0 0
        %1093 = vmatprep.subr.bf16.mxu0 0
        %1094 = vmatpush1.bf16.msra.mxu0 0
        %1095 = vmatprep.subr.bf16.mxu0 0
        %1096 = vmatpush1.bf16.msra.mxu0 0
        %1097 = vmatprep.subr.bf16.mxu0 0
        %1098 = vmatpush1.bf16.msra.mxu0 0
        %1099 = vmatprep.subr.bf16.mxu0 0
        %1100 = vmatpush1.bf16.msra.mxu0 0
        %1101 = vmatprep.mubr.bf16.mxu0 0
        %1102 = vmatmul.mubr.bf16.gmra.mrb[0].mxu0 %v997
        %v1103 = vpop.f32.mrb[0].mxu0
        %v1104 = vadd.f32 %v1019, %v1103
        %v1105 = vpop.f32.mrb[0].mxu0
        %v1106 = vpop.f32.mrb[0].mxu0
        %v1107 = vpop.f32.mrb[0].mxu0
        %1108 = vdwg.mxu0
        %v1109 = vld [vmem:[#allocation11] sm:$0xf]
        %v1110 = vld [vmem:[#allocation11 + $0x4] sm:$0xf]
        %v1111 = vld [vmem:[#allocation11 + $0x8] sm:$0xf]
        %v1112 = vld [vmem:[#allocation11 + $0xc] sm:$0xf]
        %v1113 = vld [vmem:[#allocation11 + $0x10] sm:$0xf]
        %v1114 = vld [vmem:[#allocation11 + $0x14] sm:$0xf]
        %v1115 = vld [vmem:[#allocation11 + $0x18] sm:$0xf]
        %v1116 = vld [vmem:[#allocation11 + $0x1c] sm:$0xf]
        %v1117 = vld [vmem:[#allocation11 + $0x20] sm:$0xf]
        %v1118 = vld [vmem:[#allocation11 + $0x24] sm:$0xf]
        %v1119 = vld [vmem:[#allocation11 + $0x28] sm:$0xf]
        %v1120 = vld [vmem:[#allocation11 + $0x2c] sm:$0xf]
        %v1121 = vld [vmem:[#allocation11 + $0x30] sm:$0xf]
        %v1122 = vld [vmem:[#allocation11 + $0x34] sm:$0xf]
        %v1123 = vld [vmem:[#allocation11 + $0x38] sm:$0xf]
        %v1124 = vld [vmem:[#allocation11 + $0x3c] sm:$0xf]
        %v1125 = vld [vmem:[%s9] sm:$0x1]
        %v1127 = vlaneseq
        %v1128 = vshrl.u32 %v1127, 7
        %v1129 = vsub.s32 0, %v1128
        %v1130 = vrot.slane %v1125, %v1129
        %v1148 = vunpack.c.l.b16 %v1109
        %v1149 = vunpack.c.l.b16 %v1110
        %v1150 = vunpack.c.l.b16 %v1111
        %v1151 = vunpack.c.l.b16 %v1112
        %v1152 = vunpack.c.l.b16 %v1113
        %v1153 = vunpack.c.l.b16 %v1114
        %v1154 = vunpack.c.l.b16 %v1115
        %v1155 = vunpack.c.l.b16 %v1116
        %v1156 = vunpack.c.l.b16 %v1117
        %v1157 = vunpack.c.l.b16 %v1118
        %v1158 = vunpack.c.l.b16 %v1119
        %v1159 = vunpack.c.l.b16 %v1120
        %v1160 = vunpack.c.l.b16 %v1121
        %v1161 = vunpack.c.l.b16 %v1122
        %v1162 = vunpack.c.l.b16 %v1123
        %v1163 = vunpack.c.l.b16 %v1124
        %v1164 = vpack.c.b16 %v1149, %v1148
        %v1165 = vpack.c.b16 %v1151, %v1150
        %v1166 = vpack.c.b16 %v1153, %v1152
        %v1167 = vpack.c.b16 %v1155, %v1154
        %v1168 = vpack.c.b16 %v1157, %v1156
        %v1169 = vpack.c.b16 %v1159, %v1158
        %v1170 = vpack.c.b16 %v1161, %v1160
        %v1171 = vpack.c.b16 %v1163, %v1162
        %1180 = vmatprep.subr.bf16.mxu0 0
        %1181 = vmatpush1.bf16.msra.mxu0 %v1164
        %1182 = vmatprep.subr.bf16.mxu0 0
        %1183 = vmatpush1.bf16.msra.mxu0 %v1165
        %1184 = vmatprep.subr.bf16.mxu0 0
        %1185 = vmatpush1.bf16.msra.mxu0 %v1166
        %1186 = vmatprep.subr.bf16.mxu0 0
        %1187 = vmatpush1.bf16.msra.mxu0 %v1167
        %1188 = vmatprep.subr.bf16.mxu0 0
        %1189 = vmatpush1.bf16.msra.mxu0 %v1168
        %1190 = vmatprep.subr.bf16.mxu0 0
        %1191 = vmatpush1.bf16.msra.mxu0 %v1169
        %1192 = vmatprep.subr.bf16.mxu0 0
        %1193 = vmatpush1.bf16.msra.mxu0 %v1170
        %1194 = vmatprep.subr.bf16.mxu0 0
        %1195 = vmatpush1.bf16.msra.mxu0 %v1171
        %1196 = vmatprep.subr.bf16.mxu0 0
        %1197 = vmatpush1.bf16.msra.mxu0 0
        %1198 = vmatprep.subr.bf16.mxu0 0
        %1199 = vmatpush1.bf16.msra.mxu0 0
        %1200 = vmatprep.subr.bf16.mxu0 0
        %1201 = vmatpush1.bf16.msra.mxu0 0
        %1202 = vmatprep.subr.bf16.mxu0 0
        %1203 = vmatpush1.bf16.msra.mxu0 0
        %1204 = vmatprep.subr.bf16.mxu0 0
        %1205 = vmatpush1.bf16.msra.mxu0 0
        %1206 = vmatprep.subr.bf16.mxu0 0
        %1207 = vmatpush1.bf16.msra.mxu0 0
        %1208 = vmatprep.subr.bf16.mxu0 0
        %1209 = vmatpush1.bf16.msra.mxu0 0
        %1210 = vmatprep.subr.bf16.mxu0 0
        %1211 = vmatpush1.bf16.msra.mxu0 0
        %1212 = vmatprep.mubr.bf16.mxu0 0
        %1213 = vmatmul.mubr.bf16.gmra.mrb[0].mxu0 %v610
        %v1214 = vpop.f32.mrb[0].mxu0
        %v1215 = vadd.f32 %v1130, %v1214
        %v1216 = vpop.f32.mrb[0].mxu0
        %v1217 = vpop.f32.mrb[0].mxu0
        %v1218 = vpop.f32.mrb[0].mxu0
        %1219 = vdwg.mxu0
        %v1220 = vadd.f32 %v1104, %v1215
        %v1221 = vmax.f32 %v1220, 0.0
        %v1222 = vpack.c.bf16 %v1221, %v1221
        %1223 = vst [vmem:[%s491] sm:$0xf] %v1222
        %s1224 = sand.u32 %s278, 1
        %s1225 = scalar_lea.sflag [#allocation4], %s1224
        %s1226 = sand.u32 %s278, 1
        %s1227 = smul.addr %s1226, 4
        %s1228 = scalar_lea.vmem [#allocation13], %s1227
        // Predicated region
        $region85: #{tpu_custom_call.1} parent=59 // pred_check
          %p1229 = pneg %p288
        $region86: #{tpu_custom_call.1} parent=59 // pred_check_branch
          %1231 = sbr.rel (%p1229) target = $region88
        $region87: #{tpu_custom_call.1} parent=59 // pred_region
          %s1233 = ssub.s32 64, 64
          %1234 = vsyncadd %s1225, %s1233
          %s1235 = smul.addr %s36, 2
          %s1236 = sadd.s32 %s37, %s1235
          %s1237 = smul.addr %s1236, 64
          %s1238 = scalar_lea.hbm %s10, %s1237
          %s1240 = sshll.u32 %s1228, 4
          %s1241 = int_to_ptr.vmem [resolvable:$true] %s1240
          %1243 = dma.vmem_to_hbm [thread:$0]  %s1241, 64, %s1238, %s1225
        $region88: #{tpu_custom_call.1} parent=59 // pred_fallthru
          _
      $region60: #{tpu_custom_call.1} parent=5 // pred_fallthru
        _
      %p1244 = scmp.le.s32.totalorder 2, %s27
      // Predicated region
      $region89: #{tpu_custom_call.1} parent=5 // pred_check
        %p1245 = pneg %p1244
      $region90: #{tpu_custom_call.1} parent=5 // pred_check_branch
        %1247 = sbr.rel (%p1245) target = $region92
      $region91: #{tpu_custom_call.1} parent=5 // pred_region
        %s1248 = ssub.s32 %s27, 2
        // Predicated region
        $region93: #{tpu_custom_call.1} parent=91 // pred_check
          %p1249 = pneg %p294
        $region94: #{tpu_custom_call.1} parent=91 // pred_check_branch
          %1251 = sbr.rel (%p1249) target = $region96
        $region95: #{tpu_custom_call.1} parent=91 // pred_region
          %s1252 = sand.u32 %s279, 1
          %s1253 = scalar_lea.sflag [#allocation4], %s1252
          %s1254 = sand.u32 %s279, 1
          %s1255 = smul.addr %s1254, 4
          %s1256 = scalar_lea.vmem [#allocation13], %s1255
          %1257 = dma.done %s1253, 64
        $region96: #{tpu_custom_call.1} parent=91 // pred_fallthru
          _
      $region92: #{tpu_custom_call.1} parent=5 // pred_fallthru
        _
    $region6: #{tpu_custom_call.1} parent=1 // loop_footer
      %s31 = sadd.s32 1, %s27
    $region7: #{tpu_custom_call.1} parent=1 // loop_footer_branch
      %26 = sbr.rel target = $region3
    $region8: #{tpu_custom_call.1} parent=1 // loop_exit
      _
    %1258 = vsyncpa [#allocation3], 1
    %s1259 = scalar_lea.sflag [#allocation3], 1
    %1260 = vsyncpa %s1259, 1
    %1261 = vsyncpa [#allocation6], 1
    %s1262 = scalar_lea.sflag [#allocation6], 1
    %1263 = vsyncpa %s1262, 1
    %1264 = vsyncpa [#allocation9], 1
    %1265 = vsyncpa [#allocation12], 1
    %1266 = vsyncpa [#allocation4], 1
    %s1267 = scalar_lea.sflag [#allocation4], 1
    %1268 = vsyncpa %s1267, 1

</llo_original>
